<compile_context>
chip_gen: v7x
topology: tpu7x:2x2x1
jax: 0.10.0
libtpu: 0.0.40
codegen_flags: <defaults>
</compile_context>

<pallas_src>
import jax
import jax.numpy as jnp
from jax.experimental import pallas as pl
from jax.experimental.pallas import tpu as pltpu


def tweetnet_kernel(x_ref, len_ref, wih_ref, whh_ref, b_ref, wfc_ref, bfc_ref,
                    out_ref, gx_sc, feat_sc):
    # x_ref:   [T, BT, D]  f32  embeddings (time-major, batch tile)
    # len_ref: [BT, 1]     i32  sequence lengths
    # wih_ref: [D, 4H]     f32  input->gate weights (transposed)
    # whh_ref: [H, 4H]     f32  hidden->gate weights (transposed)
    # b_ref:   [1, 4H]     f32  b_ih + b_hh
    # wfc_ref: [2H, O]     f32  classifier weight (transposed)
    # bfc_ref: [1, O]      f32  classifier bias
    # out_ref: [BT, O]     f32  sigmoid(logits)
    # gx_sc:   [T, BT, 4H] f32  precomputed input-gate projections
    # feat_sc: [BT, 2H]    f32  [mean | max] classifier input
    T, BT, D = x_ref.shape
    H4 = gx_sc.shape[2]
    H = H4 // 4

    # ---- pre-pass: one big matmul for the input projection of ALL steps ----
    # gates_x[T*BT, 4H] = x[T*BT, D] @ Wih[D, 4H] + (b_ih + b_hh)
    gx = jnp.dot(x_ref[...].reshape(T * BT, D), wih_ref[...],
                 preferred_element_type=jnp.float32) + b_ref[...]
    gx_sc[...] = gx.reshape(T, BT, H4)

    lengths = len_ref[...]                       # [BT, 1] int32
    whh = whh_ref[...]                           # hoisted: loaded once

    # ---- serial LSTM recurrence (h, c, sum, max carried in vregs) ----------
    def step(t, carry):
        h, c, s, m = carry
        gates = gx_sc[t] + jnp.dot(h, whh,
                                   preferred_element_type=jnp.float32)  # [BT,4H]
        # Full-vreg transcendentals, then slice (2 EUP pushes instead of 4).
        sig = jax.nn.sigmoid(gates)
        tah = jnp.tanh(gates)
        i_g = sig[:, 0 * H:1 * H]
        f_g = sig[:, 1 * H:2 * H]
        g_g = tah[:, 2 * H:3 * H]
        o_g = sig[:, 3 * H:4 * H]

        c_new = f_g * c + i_g * g_g
        h_new = o_g * jnp.tanh(c_new)

        # pack_padded / pad_packed semantics: outputs for t >= length[b] are 0.
        out_t = jnp.where(t < lengths, h_new, 0.0)
        return h_new, c_new, s + out_t, jnp.maximum(m, out_t)

    zeros = jnp.zeros((BT, H), jnp.float32)
    neg_inf = jnp.full((BT, H), -jnp.inf, jnp.float32)
    unroll = True if T <= 16 else 4              # guard full unroll at large T
    _, _, sum_h, max_h = jax.lax.fori_loop(
        0, T, step, (zeros, zeros, zeros, neg_inf), unroll=unroll)

    # ---- pooling + classifier ----------------------------------------------
    # Write mean/max halves directly into a lane-contiguous (BT, 2H) scratch
    # (no jnp.concatenate relayout).  Exact reciprocal keeps parity with the
    # reference divide.
    inv_len = pl.reciprocal(lengths.astype(jnp.float32), approx=False)  # [BT,1]
    feat_sc[:, 0:H] = sum_h * inv_len            # masked mean
    feat_sc[:, H:2 * H] = max_h                  # max (pad positions are 0)
    logits = jnp.dot(feat_sc[...], wfc_ref[...],
                     preferred_element_type=jnp.float32) + bfc_ref[...]
    out_ref[...] = jax.nn.sigmoid(logits)


def tweetnet_forward(input_ids, lengths, params, *, b_tile=None):
    """input_ids: [B, T] int32, lengths: [B] int32 -> [B, O] f32 (sigmoid probs)."""
    emb = params["emb"]                    # [V, D]
    B, T = input_ids.shape
    D = emb.shape[1]
    H = params["whh"].shape[1]             # whh: [4H, H]
    O = params["wfc"].shape[0]             # wfc: [O, 2H]

    # glue: embedding gather + time-major transpose
    x = jnp.take(emb, input_ids, axis=0)           # [B, T, D]
    x = jnp.transpose(x, (1, 0, 2))                # [T, B, D]

    wih_t = params["wih"].T                        # [D, 4H]
    whh_t = params["whh"].T                        # [H, 4H]
    b = (params["bih"] + params["bhh"])[None, :]   # [1, 4H]
    wfc_t = params["wfc"].T                        # [2H, O]
    bfc = params["bfc"][None, :]                   # [1, O]
    len2d = lengths.astype(jnp.int32)[:, None]     # [B, 1]

    # Batch tile (parallel grid axis): trivially 1 program at toy shapes, but
    # lets Mosaic shard batch tiles across both v7x TensorCores as B grows.
    if b_tile is None:
        b_tile = B if B <= 8 else 8
    assert B % b_tile == 0, "batch must be a multiple of the batch tile"
    grid = (B // b_tile,)

    grid_spec = pltpu.PrefetchScalarGridSpec(
        num_scalar_prefetch=0,
        grid=grid,
        in_specs=[
            pl.BlockSpec((T, b_tile, D), lambda i: (0, i, 0)),     # x
            pl.BlockSpec((b_tile, 1), lambda i: (i, 0)),           # lengths
            pl.BlockSpec((D, 4 * H), lambda i: (0, 0)),            # Wih^T
            pl.BlockSpec((H, 4 * H), lambda i: (0, 0)),            # Whh^T
            pl.BlockSpec((1, 4 * H), lambda i: (0, 0)),            # bias
            pl.BlockSpec((2 * H, O), lambda i: (0, 0)),            # Wfc^T
            pl.BlockSpec((1, O), lambda i: (0, 0)),                # bfc
        ],
        out_specs=pl.BlockSpec((b_tile, O), lambda i: (i, 0)),
        scratch_shapes=[
            pltpu.VMEM((T, b_tile, 4 * H), jnp.float32),   # precomputed gates_x
            pltpu.VMEM((b_tile, 2 * H), jnp.float32),      # [mean | max] feat
        ],
    )

    return pl.pallas_call(
        tweetnet_kernel,
        out_shape=jax.ShapeDtypeStruct((B, O), jnp.float32),
        grid_spec=grid_spec,
        compiler_params=pltpu.CompilerParams(
            dimension_semantics=("parallel",),
            vmem_limit_bytes=32 * 1024 * 1024,
        ),
    )(x, len2d, wih_t, whh_t, b, wfc_t, bfc)


def tweetnet_reference(input_ids, lengths, params):
    """Pure-JAX reference mirroring the PyTorch forward (eval mode)."""
    emb = params["emb"]
    x = jnp.take(emb, input_ids, axis=0)           # [B, T, D]
    B, T, D = x.shape
    H = params["whh"].shape[1]
    wih, whh = params["wih"], params["whh"]
    b = params["bih"] + params["bhh"]

    h = jnp.zeros((B, H), jnp.float32)
    c = jnp.zeros((B, H), jnp.float32)
    outs = []
    for t in range(T):
        gates = x[:, t, :] @ wih.T + h @ whh.T + b
        i_g = jax.nn.sigmoid(gates[:, 0 * H:1 * H])
        f_g = jax.nn.sigmoid(gates[:, 1 * H:2 * H])
        g_g = jnp.tanh(gates[:, 2 * H:3 * H])
        o_g = jax.nn.sigmoid(gates[:, 3 * H:4 * H])
        c = f_g * c + i_g * g_g
        h = o_g * jnp.tanh(c)
        mask = (t < lengths)[:, None]
        outs.append(jnp.where(mask, h, 0.0))
    lstm_out = jnp.stack(outs, axis=1)             # [B, T, H], zero-padded
    mean_feat = lstm_out.sum(axis=1) / lengths.astype(jnp.float32)[:, None]
    max_feat = lstm_out.max(axis=1)
    feat = jnp.concatenate([mean_feat, max_feat], axis=1)
    logits = feat @ params["wfc"].T + params["bfc"]
    return jax.nn.sigmoid(logits)


def init_params(key, vocab_size, input_size, hidden_size, output_size):
    ks = jax.random.split(key, 7)
    scale = 0.1
    emb = scale * jax.random.normal(ks[0], (vocab_size, input_size), jnp.float32)
    emb = emb.at[vocab_size - 1].set(0.0)          # padding_idx = len(vocab) - 1
    return {
        "emb": emb,
        "wih": scale * jax.random.normal(ks[1], (4 * hidden_size, input_size), jnp.float32),
        "whh": scale * jax.random.normal(ks[2], (4 * hidden_size, hidden_size), jnp.float32),
        "bih": scale * jax.random.normal(ks[3], (4 * hidden_size,), jnp.float32),
        "bhh": scale * jax.random.normal(ks[4], (4 * hidden_size,), jnp.float32),
        "wfc": scale * jax.random.normal(ks[5], (output_size, 2 * hidden_size), jnp.float32),
        "bfc": scale * jax.random.normal(ks[6], (output_size,), jnp.float32),
    }


if __name__ == "__main__":
    # Small shapes consistent with the module: unidirectional LSTM backbone,
    # cat_max_and_mean=True, inference (dropout = identity).
    V, D, H, O = 32, 16, 32, 2      # vocab, embedding dim, hidden, output_size
    B, T = 8, 8                     # batch, max sequence length

    key = jax.random.PRNGKey(0)
    k_param, k_ids = jax.random.split(key)
    params = init_params(k_param, V, D, H, O)

    lengths = jnp.array([8, 5, 3, 8, 6, 2, 7, 4], dtype=jnp.int32)  # max == T
    input_ids = jax.random.randint(k_ids, (B, T), 0, V - 1, dtype=jnp.int32)
    # place padding token (V-1) beyond each sequence's length
    t_idx = jnp.arange(T)[None, :]
    input_ids = jnp.where(t_idx < lengths[:, None], input_ids, V - 1)

    out = tweetnet_forward(input_ids, lengths, params)
    out = jax.block_until_ready(out)

    ref = jax.block_until_ready(tweetnet_reference(input_ids, lengths, params))
    assert out.shape == (B, O) and out.dtype == jnp.float32
    assert bool(jnp.all(jnp.isfinite(out)))
    assert bool(jnp.allclose(out, ref, atol=1e-4, rtol=1e-4)), (out, ref)
    print("KERNEL_OK")
</pallas_src>

<mosaic_0001>
module attributes {stable_mosaic.version = 11 : i64} {
  func.func @tweetnet_kernel(%arg0: i32, %arg1: memref<8x8x16xf32, #tpu.memory_space<vmem>>, %arg2: memref<8x1xi32, #tpu.memory_space<vmem>>, %arg3: memref<16x128xf32, #tpu.memory_space<vmem>>, %arg4: memref<32x128xf32, #tpu.memory_space<vmem>>, %arg5: memref<1x128xf32, #tpu.memory_space<vmem>>, %arg6: memref<64x2xf32, #tpu.memory_space<vmem>>, %arg7: memref<1x2xf32, #tpu.memory_space<vmem>>, %arg8: memref<8x2xf32, #tpu.memory_space<vmem>>, %arg9: memref<8x8x128xf32, #tpu.memory_space<vmem>>, %arg10: memref<8x64xf32, #tpu.memory_space<vmem>>) attributes {dimension_semantics = [#tpu.dimension_semantics<parallel>], iteration_bounds = array<i64: 1>, scalar_prefetch = 0 : i64, scratch_operands = 2 : i64, tpu.core_type = #tpu.core_type<tc>, window_params = [{transform_indices = @transform_0, window_bounds = array<i64: 8, 8, 16>}, {transform_indices = @transform_1, window_bounds = array<i64: 8, 1>}, {pipeline_mode = #tpu.pipeline_mode<synchronous>, transform_indices = @transform_2, window_bounds = array<i64: 16, 128>}, {pipeline_mode = #tpu.pipeline_mode<synchronous>, transform_indices = @transform_3, window_bounds = array<i64: 32, 128>}, {pipeline_mode = #tpu.pipeline_mode<synchronous>, transform_indices = @transform_4, window_bounds = array<i64: 1, 128>}, {pipeline_mode = #tpu.pipeline_mode<synchronous>, transform_indices = @transform_5, window_bounds = array<i64: 64, 2>}, {pipeline_mode = #tpu.pipeline_mode<synchronous>, transform_indices = @transform_6, window_bounds = array<i64: 1, 2>}, {transform_indices = @transform_7, window_bounds = array<i64: 8, 2>}]} {
    %c0 = arith.constant 0 : index
    %c0_0 = arith.constant 0 : index
    %c0_1 = arith.constant 0 : index
    %0 = vector.load %arg1[%c0, %c0_0, %c0_1] : memref<8x8x16xf32, #tpu.memory_space<vmem>>, vector<8x8x16xf32>
    %1 = vector.shape_cast %0 : vector<8x8x16xf32> to vector<64x16xf32>
    %c0_2 = arith.constant 0 : index
    %c0_3 = arith.constant 0 : index
    %2 = vector.load %arg3[%c0_2, %c0_3] : memref<16x128xf32, #tpu.memory_space<vmem>>, vector<16x128xf32>
    %cst = arith.constant dense<0.000000e+00> : vector<64x128xf32>
    %3 = tpu.matmul %1, %2, %cst {dimension_numbers = #tpu.dot_dimension_numbers<[1], [0], [0], [1], [0, 0, 1, 1], [], []>} : vector<64x16xf32>, vector<16x128xf32>, vector<64x128xf32> -> vector<64x128xf32>
    %c0_4 = arith.constant 0 : index
    %c0_5 = arith.constant 0 : index
    %4 = vector.load %arg5[%c0_4, %c0_5] : memref<1x128xf32, #tpu.memory_space<vmem>>, vector<1x128xf32>
    %5 = vector.broadcast %4 : vector<1x128xf32> to vector<64x128xf32>
    %6 = arith.addf %3, %5 : vector<64x128xf32>
    %7 = vector.shape_cast %6 : vector<64x128xf32> to vector<8x8x128xf32>
    %c0_6 = arith.constant 0 : index
    %c0_7 = arith.constant 0 : index
    %c0_8 = arith.constant 0 : index
    %8 = vector.load %arg9[%c0_6, %c0_7, %c0_8] : memref<8x8x128xf32, #tpu.memory_space<vmem>>, vector<8x8x128xf32>
    tpu.vector_store %arg9[%c0_6, %c0_7, %c0_8], %7 {strides = array<i32>} : memref<8x8x128xf32, #tpu.memory_space<vmem>>, vector<8x8x128xf32>,
    %c0_9 = arith.constant 0 : index
    %c0_10 = arith.constant 0 : index
    %9 = vector.load %arg2[%c0_9, %c0_10] : memref<8x1xi32, #tpu.memory_space<vmem>>, vector<8x1xi32>
    %c0_11 = arith.constant 0 : index
    %c0_12 = arith.constant 0 : index
    %10 = vector.load %arg4[%c0_11, %c0_12] : memref<32x128xf32, #tpu.memory_space<vmem>>, vector<32x128xf32>
    %cst_13 = arith.constant 0.000000e+00 : f32
    %11 = vector.broadcast %cst_13 : f32 to vector<8x32xf32>
    %cst_14 = arith.constant 0xFF800000 : f32
    %12 = vector.broadcast %cst_14 : f32 to vector<8x32xf32>
    %c0_i32 = arith.constant 0 : i32
    %13 = arith.index_cast %c0_i32 : i32 to index
    %c0_15 = arith.constant 0 : index
    %c0_16 = arith.constant 0 : index
    %14 = vector.load %arg9[%13, %c0_15, %c0_16] : memref<8x8x128xf32, #tpu.memory_space<vmem>>, vector<1x8x128xf32>
    %15 = vector.shape_cast %14 : vector<1x8x128xf32> to vector<8x128xf32>
    %cst_17 = arith.constant dense<0.000000e+00> : vector<8x128xf32>
    %16 = tpu.matmul %11, %10, %cst_17 {dimension_numbers = #tpu.dot_dimension_numbers<[1], [0], [0], [1], [0, 0, 1, 1], [], []>} : vector<8x32xf32>, vector<32x128xf32>, vector<8x128xf32> -> vector<8x128xf32>
    %17 = arith.addf %15, %16 : vector<8x128xf32>
    %18 = arith.negf %17 : vector<8x128xf32>
    %19 = math.exp %18 : vector<8x128xf32>
    %cst_18 = arith.constant 1.000000e+00 : f32
    %20 = vector.broadcast %cst_18 : f32 to vector<8x128xf32>
    %21 = arith.addf %20, %19 : vector<8x128xf32>
    %22 = arith.divf %20, %21 : vector<8x128xf32>
    %23 = math.tanh %17 : vector<8x128xf32>
    %24 = vector.extract_strided_slice %22 {offsets = [0, 0], sizes = [8, 32], strides = [1, 1]} : vector<8x128xf32> to vector<8x32xf32>
    %25 = vector.extract_strided_slice %22 {offsets = [0, 32], sizes = [8, 32], strides = [1, 1]} : vector<8x128xf32> to vector<8x32xf32>
    %26 = vector.extract_strided_slice %23 {offsets = [0, 64], sizes = [8, 32], strides = [1, 1]} : vector<8x128xf32> to vector<8x32xf32>
    %27 = vector.extract_strided_slice %22 {offsets = [0, 96], sizes = [8, 32], strides = [1, 1]} : vector<8x128xf32> to vector<8x32xf32>
    %28 = arith.mulf %25, %11 : vector<8x32xf32>
    %29 = arith.mulf %24, %26 : vector<8x32xf32>
    %30 = arith.addf %28, %29 : vector<8x32xf32>
    %31 = math.tanh %30 : vector<8x32xf32>
    %32 = arith.mulf %27, %31 : vector<8x32xf32>
    %33 = vector.broadcast %c0_i32 : i32 to vector<8x1xi32>
    %34 = arith.cmpi slt, %33, %9 : vector<8x1xi32>
    %cst_19 = arith.constant 0.000000e+00 : f32
    %35 = vector.shape_cast %34 : vector<8x1xi1> to vector<8x1xi1>
    %36 = vector.broadcast %35 : vector<8x1xi1> to vector<8x32xi1>
    %37 = vector.broadcast %cst_19 : f32 to vector<8x32xf32>
    %38 = arith.select %36, %32, %37 : vector<8x32xi1>, vector<8x32xf32>
    %39 = arith.addf %11, %38 : vector<8x32xf32>
    %40 = arith.maximumf %12, %38 : vector<8x32xf32>
    %c1_i32 = arith.constant 1 : i32
    %41 = arith.index_cast %c1_i32 : i32 to index
    %c0_20 = arith.constant 0 : index
    %c0_21 = arith.constant 0 : index
    %42 = vector.load %arg9[%41, %c0_20, %c0_21] : memref<8x8x128xf32, #tpu.memory_space<vmem>>, vector<1x8x128xf32>
    %43 = vector.shape_cast %42 : vector<1x8x128xf32> to vector<8x128xf32>
    %cst_22 = arith.constant dense<0.000000e+00> : vector<8x128xf32>
    %44 = tpu.matmul %32, %10, %cst_22 {dimension_numbers = #tpu.dot_dimension_numbers<[1], [0], [0], [1], [0, 0, 1, 1], [], []>} : vector<8x32xf32>, vector<32x128xf32>, vector<8x128xf32> -> vector<8x128xf32>
    %45 = arith.addf %43, %44 : vector<8x128xf32>
    %46 = arith.negf %45 : vector<8x128xf32>
    %47 = math.exp %46 : vector<8x128xf32>
    %cst_23 = arith.constant 1.000000e+00 : f32
    %48 = vector.broadcast %cst_23 : f32 to vector<8x128xf32>
    %49 = arith.addf %48, %47 : vector<8x128xf32>
    %50 = arith.divf %48, %49 : vector<8x128xf32>
    %51 = math.tanh %45 : vector<8x128xf32>
    %52 = vector.extract_strided_slice %50 {offsets = [0, 0], sizes = [8, 32], strides = [1, 1]} : vector<8x128xf32> to vector<8x32xf32>
    %53 = vector.extract_strided_slice %50 {offsets = [0, 32], sizes = [8, 32], strides = [1, 1]} : vector<8x128xf32> to vector<8x32xf32>
    %54 = vector.extract_strided_slice %51 {offsets = [0, 64], sizes = [8, 32], strides = [1, 1]} : vector<8x128xf32> to vector<8x32xf32>
    %55 = vector.extract_strided_slice %50 {offsets = [0, 96], sizes = [8, 32], strides = [1, 1]} : vector<8x128xf32> to vector<8x32xf32>
    %56 = arith.mulf %53, %30 : vector<8x32xf32>
    %57 = arith.mulf %52, %54 : vector<8x32xf32>
    %58 = arith.addf %56, %57 : vector<8x32xf32>
    %59 = math.tanh %58 : vector<8x32xf32>
    %60 = arith.mulf %55, %59 : vector<8x32xf32>
    %61 = vector.broadcast %c1_i32 : i32 to vector<8x1xi32>
    %62 = arith.cmpi slt, %61, %9 : vector<8x1xi32>
    %cst_24 = arith.constant 0.000000e+00 : f32
    %63 = vector.shape_cast %62 : vector<8x1xi1> to vector<8x1xi1>
    %64 = vector.broadcast %63 : vector<8x1xi1> to vector<8x32xi1>
    %65 = vector.broadcast %cst_24 : f32 to vector<8x32xf32>
    %66 = arith.select %64, %60, %65 : vector<8x32xi1>, vector<8x32xf32>
    %67 = arith.addf %39, %66 : vector<8x32xf32>
    %68 = arith.maximumf %40, %66 : vector<8x32xf32>
    %c2_i32 = arith.constant 2 : i32
    %69 = arith.index_cast %c2_i32 : i32 to index
    %c0_25 = arith.constant 0 : index
    %c0_26 = arith.constant 0 : index
    %70 = vector.load %arg9[%69, %c0_25, %c0_26] : memref<8x8x128xf32, #tpu.memory_space<vmem>>, vector<1x8x128xf32>
    %71 = vector.shape_cast %70 : vector<1x8x128xf32> to vector<8x128xf32>
    %cst_27 = arith.constant dense<0.000000e+00> : vector<8x128xf32>
    %72 = tpu.matmul %60, %10, %cst_27 {dimension_numbers = #tpu.dot_dimension_numbers<[1], [0], [0], [1], [0, 0, 1, 1], [], []>} : vector<8x32xf32>, vector<32x128xf32>, vector<8x128xf32> -> vector<8x128xf32>
    %73 = arith.addf %71, %72 : vector<8x128xf32>
    %74 = arith.negf %73 : vector<8x128xf32>
    %75 = math.exp %74 : vector<8x128xf32>
    %cst_28 = arith.constant 1.000000e+00 : f32
    %76 = vector.broadcast %cst_28 : f32 to vector<8x128xf32>
    %77 = arith.addf %76, %75 : vector<8x128xf32>
    %78 = arith.divf %76, %77 : vector<8x128xf32>
    %79 = math.tanh %73 : vector<8x128xf32>
    %80 = vector.extract_strided_slice %78 {offsets = [0, 0], sizes = [8, 32], strides = [1, 1]} : vector<8x128xf32> to vector<8x32xf32>
    %81 = vector.extract_strided_slice %78 {offsets = [0, 32], sizes = [8, 32], strides = [1, 1]} : vector<8x128xf32> to vector<8x32xf32>
    %82 = vector.extract_strided_slice %79 {offsets = [0, 64], sizes = [8, 32], strides = [1, 1]} : vector<8x128xf32> to vector<8x32xf32>
    %83 = vector.extract_strided_slice %78 {offsets = [0, 96], sizes = [8, 32], strides = [1, 1]} : vector<8x128xf32> to vector<8x32xf32>
    %84 = arith.mulf %81, %58 : vector<8x32xf32>
    %85 = arith.mulf %80, %82 : vector<8x32xf32>
    %86 = arith.addf %84, %85 : vector<8x32xf32>
    %87 = math.tanh %86 : vector<8x32xf32>
    %88 = arith.mulf %83, %87 : vector<8x32xf32>
    %89 = vector.broadcast %c2_i32 : i32 to vector<8x1xi32>
    %90 = arith.cmpi slt, %89, %9 : vector<8x1xi32>
    %cst_29 = arith.constant 0.000000e+00 : f32
    %91 = vector.shape_cast %90 : vector<8x1xi1> to vector<8x1xi1>
    %92 = vector.broadcast %91 : vector<8x1xi1> to vector<8x32xi1>
    %93 = vector.broadcast %cst_29 : f32 to vector<8x32xf32>
    %94 = arith.select %92, %88, %93 : vector<8x32xi1>, vector<8x32xf32>
    %95 = arith.addf %67, %94 : vector<8x32xf32>
    %96 = arith.maximumf %68, %94 : vector<8x32xf32>
    %c3_i32 = arith.constant 3 : i32
    %97 = arith.index_cast %c3_i32 : i32 to index
    %c0_30 = arith.constant 0 : index
    %c0_31 = arith.constant 0 : index
    %98 = vector.load %arg9[%97, %c0_30, %c0_31] : memref<8x8x128xf32, #tpu.memory_space<vmem>>, vector<1x8x128xf32>
    %99 = vector.shape_cast %98 : vector<1x8x128xf32> to vector<8x128xf32>
    %cst_32 = arith.constant dense<0.000000e+00> : vector<8x128xf32>
    %100 = tpu.matmul %88, %10, %cst_32 {dimension_numbers = #tpu.dot_dimension_numbers<[1], [0], [0], [1], [0, 0, 1, 1], [], []>} : vector<8x32xf32>, vector<32x128xf32>, vector<8x128xf32> -> vector<8x128xf32>
    %101 = arith.addf %99, %100 : vector<8x128xf32>
    %102 = arith.negf %101 : vector<8x128xf32>
    %103 = math.exp %102 : vector<8x128xf32>
    %cst_33 = arith.constant 1.000000e+00 : f32
    %104 = vector.broadcast %cst_33 : f32 to vector<8x128xf32>
    %105 = arith.addf %104, %103 : vector<8x128xf32>
    %106 = arith.divf %104, %105 : vector<8x128xf32>
    %107 = math.tanh %101 : vector<8x128xf32>
    %108 = vector.extract_strided_slice %106 {offsets = [0, 0], sizes = [8, 32], strides = [1, 1]} : vector<8x128xf32> to vector<8x32xf32>
    %109 = vector.extract_strided_slice %106 {offsets = [0, 32], sizes = [8, 32], strides = [1, 1]} : vector<8x128xf32> to vector<8x32xf32>
    %110 = vector.extract_strided_slice %107 {offsets = [0, 64], sizes = [8, 32], strides = [1, 1]} : vector<8x128xf32> to vector<8x32xf32>
    %111 = vector.extract_strided_slice %106 {offsets = [0, 96], sizes = [8, 32], strides = [1, 1]} : vector<8x128xf32> to vector<8x32xf32>
    %112 = arith.mulf %109, %86 : vector<8x32xf32>
    %113 = arith.mulf %108, %110 : vector<8x32xf32>
    %114 = arith.addf %112, %113 : vector<8x32xf32>
    %115 = math.tanh %114 : vector<8x32xf32>
    %116 = arith.mulf %111, %115 : vector<8x32xf32>
    %117 = vector.broadcast %c3_i32 : i32 to vector<8x1xi32>
    %118 = arith.cmpi slt, %117, %9 : vector<8x1xi32>
    %cst_34 = arith.constant 0.000000e+00 : f32
    %119 = vector.shape_cast %118 : vector<8x1xi1> to vector<8x1xi1>
    %120 = vector.broadcast %119 : vector<8x1xi1> to vector<8x32xi1>
    %121 = vector.broadcast %cst_34 : f32 to vector<8x32xf32>
    %122 = arith.select %120, %116, %121 : vector<8x32xi1>, vector<8x32xf32>
    %123 = arith.addf %95, %122 : vector<8x32xf32>
    %124 = arith.maximumf %96, %122 : vector<8x32xf32>
    %c4_i32 = arith.constant 4 : i32
    %125 = arith.index_cast %c4_i32 : i32 to index
    %c0_35 = arith.constant 0 : index
    %c0_36 = arith.constant 0 : index
    %126 = vector.load %arg9[%125, %c0_35, %c0_36] : memref<8x8x128xf32, #tpu.memory_space<vmem>>, vector<1x8x128xf32>
    %127 = vector.shape_cast %126 : vector<1x8x128xf32> to vector<8x128xf32>
    %cst_37 = arith.constant dense<0.000000e+00> : vector<8x128xf32>
    %128 = tpu.matmul %116, %10, %cst_37 {dimension_numbers = #tpu.dot_dimension_numbers<[1], [0], [0], [1], [0, 0, 1, 1], [], []>} : vector<8x32xf32>, vector<32x128xf32>, vector<8x128xf32> -> vector<8x128xf32>
    %129 = arith.addf %127, %128 : vector<8x128xf32>
    %130 = arith.negf %129 : vector<8x128xf32>
    %131 = math.exp %130 : vector<8x128xf32>
    %cst_38 = arith.constant 1.000000e+00 : f32
    %132 = vector.broadcast %cst_38 : f32 to vector<8x128xf32>
    %133 = arith.addf %132, %131 : vector<8x128xf32>
    %134 = arith.divf %132, %133 : vector<8x128xf32>
    %135 = math.tanh %129 : vector<8x128xf32>
    %136 = vector.extract_strided_slice %134 {offsets = [0, 0], sizes = [8, 32], strides = [1, 1]} : vector<8x128xf32> to vector<8x32xf32>
    %137 = vector.extract_strided_slice %134 {offsets = [0, 32], sizes = [8, 32], strides = [1, 1]} : vector<8x128xf32> to vector<8x32xf32>
    %138 = vector.extract_strided_slice %135 {offsets = [0, 64], sizes = [8, 32], strides = [1, 1]} : vector<8x128xf32> to vector<8x32xf32>
    %139 = vector.extract_strided_slice %134 {offsets = [0, 96], sizes = [8, 32], strides = [1, 1]} : vector<8x128xf32> to vector<8x32xf32>
    %140 = arith.mulf %137, %114 : vector<8x32xf32>
    %141 = arith.mulf %136, %138 : vector<8x32xf32>
    %142 = arith.addf %140, %141 : vector<8x32xf32>
    %143 = math.tanh %142 : vector<8x32xf32>
    %144 = arith.mulf %139, %143 : vector<8x32xf32>
    %145 = vector.broadcast %c4_i32 : i32 to vector<8x1xi32>
    %146 = arith.cmpi slt, %145, %9 : vector<8x1xi32>
    %cst_39 = arith.constant 0.000000e+00 : f32
    %147 = vector.shape_cast %146 : vector<8x1xi1> to vector<8x1xi1>
    %148 = vector.broadcast %147 : vector<8x1xi1> to vector<8x32xi1>
    %149 = vector.broadcast %cst_39 : f32 to vector<8x32xf32>
    %150 = arith.select %148, %144, %149 : vector<8x32xi1>, vector<8x32xf32>
    %151 = arith.addf %123, %150 : vector<8x32xf32>
    %152 = arith.maximumf %124, %150 : vector<8x32xf32>
    %c5_i32 = arith.constant 5 : i32
    %153 = arith.index_cast %c5_i32 : i32 to index
    %c0_40 = arith.constant 0 : index
    %c0_41 = arith.constant 0 : index
    %154 = vector.load %arg9[%153, %c0_40, %c0_41] : memref<8x8x128xf32, #tpu.memory_space<vmem>>, vector<1x8x128xf32>
    %155 = vector.shape_cast %154 : vector<1x8x128xf32> to vector<8x128xf32>
    %cst_42 = arith.constant dense<0.000000e+00> : vector<8x128xf32>
    %156 = tpu.matmul %144, %10, %cst_42 {dimension_numbers = #tpu.dot_dimension_numbers<[1], [0], [0], [1], [0, 0, 1, 1], [], []>} : vector<8x32xf32>, vector<32x128xf32>, vector<8x128xf32> -> vector<8x128xf32>
    %157 = arith.addf %155, %156 : vector<8x128xf32>
    %158 = arith.negf %157 : vector<8x128xf32>
    %159 = math.exp %158 : vector<8x128xf32>
    %cst_43 = arith.constant 1.000000e+00 : f32
    %160 = vector.broadcast %cst_43 : f32 to vector<8x128xf32>
    %161 = arith.addf %160, %159 : vector<8x128xf32>
    %162 = arith.divf %160, %161 : vector<8x128xf32>
    %163 = math.tanh %157 : vector<8x128xf32>
    %164 = vector.extract_strided_slice %162 {offsets = [0, 0], sizes = [8, 32], strides = [1, 1]} : vector<8x128xf32> to vector<8x32xf32>
    %165 = vector.extract_strided_slice %162 {offsets = [0, 32], sizes = [8, 32], strides = [1, 1]} : vector<8x128xf32> to vector<8x32xf32>
    %166 = vector.extract_strided_slice %163 {offsets = [0, 64], sizes = [8, 32], strides = [1, 1]} : vector<8x128xf32> to vector<8x32xf32>
    %167 = vector.extract_strided_slice %162 {offsets = [0, 96], sizes = [8, 32], strides = [1, 1]} : vector<8x128xf32> to vector<8x32xf32>
    %168 = arith.mulf %165, %142 : vector<8x32xf32>
    %169 = arith.mulf %164, %166 : vector<8x32xf32>
    %170 = arith.addf %168, %169 : vector<8x32xf32>
    %171 = math.tanh %170 : vector<8x32xf32>
    %172 = arith.mulf %167, %171 : vector<8x32xf32>
    %173 = vector.broadcast %c5_i32 : i32 to vector<8x1xi32>
    %174 = arith.cmpi slt, %173, %9 : vector<8x1xi32>
    %cst_44 = arith.constant 0.000000e+00 : f32
    %175 = vector.shape_cast %174 : vector<8x1xi1> to vector<8x1xi1>
    %176 = vector.broadcast %175 : vector<8x1xi1> to vector<8x32xi1>
    %177 = vector.broadcast %cst_44 : f32 to vector<8x32xf32>
    %178 = arith.select %176, %172, %177 : vector<8x32xi1>, vector<8x32xf32>
    %179 = arith.addf %151, %178 : vector<8x32xf32>
    %180 = arith.maximumf %152, %178 : vector<8x32xf32>
    %c6_i32 = arith.constant 6 : i32
    %181 = arith.index_cast %c6_i32 : i32 to index
    %c0_45 = arith.constant 0 : index
    %c0_46 = arith.constant 0 : index
    %182 = vector.load %arg9[%181, %c0_45, %c0_46] : memref<8x8x128xf32, #tpu.memory_space<vmem>>, vector<1x8x128xf32>
    %183 = vector.shape_cast %182 : vector<1x8x128xf32> to vector<8x128xf32>
    %cst_47 = arith.constant dense<0.000000e+00> : vector<8x128xf32>
    %184 = tpu.matmul %172, %10, %cst_47 {dimension_numbers = #tpu.dot_dimension_numbers<[1], [0], [0], [1], [0, 0, 1, 1], [], []>} : vector<8x32xf32>, vector<32x128xf32>, vector<8x128xf32> -> vector<8x128xf32>
    %185 = arith.addf %183, %184 : vector<8x128xf32>
    %186 = arith.negf %185 : vector<8x128xf32>
    %187 = math.exp %186 : vector<8x128xf32>
    %cst_48 = arith.constant 1.000000e+00 : f32
    %188 = vector.broadcast %cst_48 : f32 to vector<8x128xf32>
    %189 = arith.addf %188, %187 : vector<8x128xf32>
    %190 = arith.divf %188, %189 : vector<8x128xf32>
    %191 = math.tanh %185 : vector<8x128xf32>
    %192 = vector.extract_strided_slice %190 {offsets = [0, 0], sizes = [8, 32], strides = [1, 1]} : vector<8x128xf32> to vector<8x32xf32>
    %193 = vector.extract_strided_slice %190 {offsets = [0, 32], sizes = [8, 32], strides = [1, 1]} : vector<8x128xf32> to vector<8x32xf32>
    %194 = vector.extract_strided_slice %191 {offsets = [0, 64], sizes = [8, 32], strides = [1, 1]} : vector<8x128xf32> to vector<8x32xf32>
    %195 = vector.extract_strided_slice %190 {offsets = [0, 96], sizes = [8, 32], strides = [1, 1]} : vector<8x128xf32> to vector<8x32xf32>
    %196 = arith.mulf %193, %170 : vector<8x32xf32>
    %197 = arith.mulf %192, %194 : vector<8x32xf32>
    %198 = arith.addf %196, %197 : vector<8x32xf32>
    %199 = math.tanh %198 : vector<8x32xf32>
    %200 = arith.mulf %195, %199 : vector<8x32xf32>
    %201 = vector.broadcast %c6_i32 : i32 to vector<8x1xi32>
    %202 = arith.cmpi slt, %201, %9 : vector<8x1xi32>
    %cst_49 = arith.constant 0.000000e+00 : f32
    %203 = vector.shape_cast %202 : vector<8x1xi1> to vector<8x1xi1>
    %204 = vector.broadcast %203 : vector<8x1xi1> to vector<8x32xi1>
    %205 = vector.broadcast %cst_49 : f32 to vector<8x32xf32>
    %206 = arith.select %204, %200, %205 : vector<8x32xi1>, vector<8x32xf32>
    %207 = arith.addf %179, %206 : vector<8x32xf32>
    %208 = arith.maximumf %180, %206 : vector<8x32xf32>
    %c7_i32 = arith.constant 7 : i32
    %209 = arith.index_cast %c7_i32 : i32 to index
    %c0_50 = arith.constant 0 : index
    %c0_51 = arith.constant 0 : index
    %210 = vector.load %arg9[%209, %c0_50, %c0_51] : memref<8x8x128xf32, #tpu.memory_space<vmem>>, vector<1x8x128xf32>
    %211 = vector.shape_cast %210 : vector<1x8x128xf32> to vector<8x128xf32>
    %cst_52 = arith.constant dense<0.000000e+00> : vector<8x128xf32>
    %212 = tpu.matmul %200, %10, %cst_52 {dimension_numbers = #tpu.dot_dimension_numbers<[1], [0], [0], [1], [0, 0, 1, 1], [], []>} : vector<8x32xf32>, vector<32x128xf32>, vector<8x128xf32> -> vector<8x128xf32>
    %213 = arith.addf %211, %212 : vector<8x128xf32>
    %214 = arith.negf %213 : vector<8x128xf32>
    %215 = math.exp %214 : vector<8x128xf32>
    %cst_53 = arith.constant 1.000000e+00 : f32
    %216 = vector.broadcast %cst_53 : f32 to vector<8x128xf32>
    %217 = arith.addf %216, %215 : vector<8x128xf32>
    %218 = arith.divf %216, %217 : vector<8x128xf32>
    %219 = math.tanh %213 : vector<8x128xf32>
    %220 = vector.extract_strided_slice %218 {offsets = [0, 0], sizes = [8, 32], strides = [1, 1]} : vector<8x128xf32> to vector<8x32xf32>
    %221 = vector.extract_strided_slice %218 {offsets = [0, 32], sizes = [8, 32], strides = [1, 1]} : vector<8x128xf32> to vector<8x32xf32>
    %222 = vector.extract_strided_slice %219 {offsets = [0, 64], sizes = [8, 32], strides = [1, 1]} : vector<8x128xf32> to vector<8x32xf32>
    %223 = vector.extract_strided_slice %218 {offsets = [0, 96], sizes = [8, 32], strides = [1, 1]} : vector<8x128xf32> to vector<8x32xf32>
    %224 = arith.mulf %221, %198 : vector<8x32xf32>
    %225 = arith.mulf %220, %222 : vector<8x32xf32>
    %226 = arith.addf %224, %225 : vector<8x32xf32>
    %227 = math.tanh %226 : vector<8x32xf32>
    %228 = arith.mulf %223, %227 : vector<8x32xf32>
    %229 = vector.broadcast %c7_i32 : i32 to vector<8x1xi32>
    %230 = arith.cmpi slt, %229, %9 : vector<8x1xi32>
    %cst_54 = arith.constant 0.000000e+00 : f32
    %231 = vector.shape_cast %230 : vector<8x1xi1> to vector<8x1xi1>
    %232 = vector.broadcast %231 : vector<8x1xi1> to vector<8x32xi1>
    %233 = vector.broadcast %cst_54 : f32 to vector<8x32xf32>
    %234 = arith.select %232, %228, %233 : vector<8x32xi1>, vector<8x32xf32>
    %235 = arith.addf %207, %234 : vector<8x32xf32>
    %236 = arith.maximumf %208, %234 : vector<8x32xf32>
    %c8_i32 = arith.constant 8 : i32
    %237 = arith.sitofp %9 : vector<8x1xi32> to vector<8x1xf32>
    %238 = tpu.reciprocal %237 : vector<8x1xf32> -> vector<8x1xf32>
    %239 = vector.broadcast %238 : vector<8x1xf32> to vector<8x32xf32>
    %240 = arith.mulf %235, %239 : vector<8x32xf32>
    %c0_55 = arith.constant 0 : index
    %c0_56 = arith.constant 0 : index
    %241 = vector.load %arg10[%c0_55, %c0_56] : memref<8x64xf32, #tpu.memory_space<vmem>>, vector<8x32xf32>
    tpu.vector_store %arg10[%c0_55, %c0_56], %240 {strides = array<i32>} : memref<8x64xf32, #tpu.memory_space<vmem>>, vector<8x32xf32>,
    %c0_57 = arith.constant 0 : index
    %c32 = arith.constant 32 : index
    %242 = vector.load %arg10[%c0_57, %c32] : memref<8x64xf32, #tpu.memory_space<vmem>>, vector<8x32xf32>
    tpu.vector_store %arg10[%c0_57, %c32], %236 {strides = array<i32>} : memref<8x64xf32, #tpu.memory_space<vmem>>, vector<8x32xf32>,
    %c0_58 = arith.constant 0 : index
    %c0_59 = arith.constant 0 : index
    %243 = vector.load %arg10[%c0_58, %c0_59] : memref<8x64xf32, #tpu.memory_space<vmem>>, vector<8x64xf32>
    %c0_60 = arith.constant 0 : index
    %c0_61 = arith.constant 0 : index
    %244 = vector.load %arg6[%c0_60, %c0_61] : memref<64x2xf32, #tpu.memory_space<vmem>>, vector<64x2xf32>
    %cst_62 = arith.constant dense<0.000000e+00> : vector<8x2xf32>
    %245 = tpu.matmul %243, %244, %cst_62 {dimension_numbers = #tpu.dot_dimension_numbers<[1], [0], [0], [1], [0, 0, 1, 1], [], []>} : vector<8x64xf32>, vector<64x2xf32>, vector<8x2xf32> -> vector<8x2xf32>
    %c0_63 = arith.constant 0 : index
    %c0_64 = arith.constant 0 : index
    %246 = vector.load %arg7[%c0_63, %c0_64] : memref<1x2xf32, #tpu.memory_space<vmem>>, vector<1x2xf32>
    %247 = vector.broadcast %246 : vector<1x2xf32> to vector<8x2xf32>
    %248 = arith.addf %245, %247 : vector<8x2xf32>
    %249 = arith.negf %248 : vector<8x2xf32>
    %250 = math.exp %249 : vector<8x2xf32>
    %cst_65 = arith.constant 1.000000e+00 : f32
    %251 = vector.broadcast %cst_65 : f32 to vector<8x2xf32>
    %252 = arith.addf %251, %250 : vector<8x2xf32>
    %253 = arith.divf %251, %252 : vector<8x2xf32>
    %c0_66 = arith.constant 0 : index
    %c0_67 = arith.constant 0 : index
    %254 = vector.load %arg8[%c0_66, %c0_67] : memref<8x2xf32, #tpu.memory_space<vmem>>, vector<8x2xf32>
    tpu.vector_store %arg8[%c0_66, %c0_67], %253 {strides = array<i32>} : memref<8x2xf32, #tpu.memory_space<vmem>>, vector<8x2xf32>,
    return
  }
  func.func @transform_0(%arg0: i32) -> (i32, i32, i32) {
    %c0_i32 = arith.constant 0 : i32
    %c0_i32_0 = arith.constant 0 : i32
    %c0_i32_1 = arith.constant 0 : i32
    return %c0_i32, %arg0, %c0_i32_0 : i32, i32, i32
  }
  func.func @transform_1(%arg0: i32) -> (i32, i32) {
    %c0_i32 = arith.constant 0 : i32
    %c0_i32_0 = arith.constant 0 : i32
    return %arg0, %c0_i32 : i32, i32
  }
  func.func @transform_2(%arg0: i32) -> (i32, i32) {
    %c0_i32 = arith.constant 0 : i32
    %c0_i32_0 = arith.constant 0 : i32
    %c0_i32_1 = arith.constant 0 : i32
    return %c0_i32, %c0_i32_0 : i32, i32
  }
  func.func @transform_3(%arg0: i32) -> (i32, i32) {
    %c0_i32 = arith.constant 0 : i32
    %c0_i32_0 = arith.constant 0 : i32
    %c0_i32_1 = arith.constant 0 : i32
    return %c0_i32, %c0_i32_0 : i32, i32
  }
  func.func @transform_4(%arg0: i32) -> (i32, i32) {
    %c0_i32 = arith.constant 0 : i32
    %c0_i32_0 = arith.constant 0 : i32
    %c0_i32_1 = arith.constant 0 : i32
    return %c0_i32, %c0_i32_0 : i32, i32
  }
  func.func @transform_5(%arg0: i32) -> (i32, i32) {
    %c0_i32 = arith.constant 0 : i32
    %c0_i32_0 = arith.constant 0 : i32
    %c0_i32_1 = arith.constant 0 : i32
    return %c0_i32, %c0_i32_0 : i32, i32
  }
  func.func @transform_6(%arg0: i32) -> (i32, i32) {
    %c0_i32 = arith.constant 0 : i32
    %c0_i32_0 = arith.constant 0 : i32
    %c0_i32_1 = arith.constant 0 : i32
    return %c0_i32, %c0_i32_0 : i32, i32
  }
  func.func @transform_7(%arg0: i32) -> (i32, i32) {
    %c0_i32 = arith.constant 0 : i32
    %c0_i32_0 = arith.constant 0 : i32
    return %arg0, %c0_i32 : i32, i32
  }
}

</mosaic_0001>

<llo_original>
// kernel: tpu_custom_call.1
$region0: #{tpu_custom_call.1}
  #allocation0 [shape = 'u32[]', space=smem, size = 0x4, offset = 0x4, fixed_abs, tag = 'smem constant byte address 0x4 - core index']
  #allocation1 [shape = 'u32[144,128]{1,0:T(1,128)}', space=vmem, size = 0x12000, scoped, tag = 'internal scratch']
  #allocation2 [shape = 'f32[8,8,128]{2,1,0:T(8,128)}', space=vmem, size = 0x8000, scoped, tag = 'scratch operand']
  #allocation3 [shape = 'f32[8,64]{1,0:T(8,128)}', space=vmem, size = 0x1000, scoped, tag = 'scratch operand']
  %s0 = inlined_call_operand.vmem [shape: f32[8,8,16], index: 0, kind: input, shape index: {}]
  %s1 = inlined_call_operand.vmem [shape: s32[8,1], index: 1, kind: input, shape index: {}]
  %s2 = inlined_call_operand.vmem [shape: f32[16,128], index: 2, kind: input, shape index: {}]
  %s3 = inlined_call_operand.hbm [shape: f32[32,128], index: 3, kind: input, shape index: {}]
  %s4 = inlined_call_operand.vmem [shape: f32[1,128], index: 4, kind: input, shape index: {}]
  %s5 = inlined_call_operand.vmem [shape: f32[64,2], index: 5, kind: input, shape index: {}]
  %s6 = inlined_call_operand.vmem [shape: f32[1,2], index: 6, kind: input, shape index: {}]
  %s7 = inlined_call_operand.vmem [shape: f32[8,2], index: 7, kind: output, shape index: {}]
  %s8 = sld [smem:[#allocation0]]
  $region42: #{tpu_custom_call.1} parent=0
    _
  %s10 = ssub.s32 1, %s8
  %s11 = scalar_select 0, %s10, %s8
  $region1: #{tpu_custom_call.1} parent=0
    #allocation4 [shape = 'u8[16384]{0}', space=vmem, size = 0x4000, scoped, tag = 'input window, operand 3, single buffered']
    #allocation5 [shape = 's32[1]{0}', space=sflag, size = 0x4, scoped, tag = 'scoped memory for tpu_custom_call.1']
    %12 = vsyncpa [#allocation5], 0
    // Predicated region
    $region2: #{tpu_custom_call.1} parent=1 // pred_check
      _
    $region3: #{tpu_custom_call.1} parent=1 // pred_check_branch
      %14 = sbr.rel (0) target = $region5
    $region4: #{tpu_custom_call.1} parent=1 // pred_region
      _
    $region5: #{tpu_custom_call.1} parent=1 // pred_fallthru
      _
    // Predicated region
    $region6: #{tpu_custom_call.1} parent=1 // pred_check
      _
    $region7: #{tpu_custom_call.1} parent=1 // pred_check_branch
      %16 = sbr.rel (0) target = $region9
    $region8: #{tpu_custom_call.1} parent=1 // pred_region
      _
    $region9: #{tpu_custom_call.1} parent=1 // pred_fallthru
      _
    // Predicated region
    $region10: #{tpu_custom_call.1} parent=1 // pred_check
      _
    $region11: #{tpu_custom_call.1} parent=1 // pred_check_branch
      %18 = sbr.rel (0) target = $region13
    $region12: #{tpu_custom_call.1} parent=1 // pred_region
      _
    $region13: #{tpu_custom_call.1} parent=1 // pred_fallthru
      _
    // Predicated region
    $region14: #{tpu_custom_call.1} parent=1 // pred_check
      _
    $region15: #{tpu_custom_call.1} parent=1 // pred_check_branch
      %20 = sbr.rel (0) target = $region17
    $region16: #{tpu_custom_call.1} parent=1 // pred_region
      %s22 = ssub.s32 512, 512
      %23 = vsyncadd [#allocation5], %s22
      %s24 = sshll.u32 [#allocation4], 4
      %s25 = int_to_ptr.vmem [resolvable:$true] %s24
      %30 = dma.hbm_to_vmem [thread:$0]  %s3, 512, %s25, [#allocation5], 128, 128, 8
    $region17: #{tpu_custom_call.1} parent=1 // pred_fallthru
      _
    // Predicated region
    $region18: #{tpu_custom_call.1} parent=1 // pred_check
      _
    $region19: #{tpu_custom_call.1} parent=1 // pred_check_branch
      %32 = sbr.rel (0) target = $region21
    $region20: #{tpu_custom_call.1} parent=1 // pred_region
      _
    $region21: #{tpu_custom_call.1} parent=1 // pred_fallthru
      _
    // Predicated region
    $region22: #{tpu_custom_call.1} parent=1 // pred_check
      _
    $region23: #{tpu_custom_call.1} parent=1 // pred_check_branch
      %34 = sbr.rel (0) target = $region25
    $region24: #{tpu_custom_call.1} parent=1 // pred_region
      _
    $region25: #{tpu_custom_call.1} parent=1 // pred_fallthru
      _
    // Predicated region
    $region26: #{tpu_custom_call.1} parent=1 // pred_check
      _
    $region27: #{tpu_custom_call.1} parent=1 // pred_check_branch
      %36 = sbr.rel (0) target = $region29
    $region28: #{tpu_custom_call.1} parent=1 // pred_region
      _
    $region29: #{tpu_custom_call.1} parent=1 // pred_fallthru
      _
    // Predicated region
    $region30: #{tpu_custom_call.1} parent=1 // pred_check
      _
    $region31: #{tpu_custom_call.1} parent=1 // pred_check_branch
      %38 = sbr.rel (0) target = $region33
    $region32: #{tpu_custom_call.1} parent=1 // pred_region
      %39 = dma.done [#allocation5], 512
    $region33: #{tpu_custom_call.1} parent=1 // pred_fallthru
      _
    %v40 = vld [vmem:[%s0] sm:$0xff]
    %v41 = vld [vmem:[%s0 + $0x8] sm:$0xff]
    %v42 = vld [vmem:[%s0 + $0x10] sm:$0xff]
    %v43 = vld [vmem:[%s0 + $0x18] sm:$0xff]
    %v44 = vld [vmem:[%s0 + $0x20] sm:$0xff]
    %v45 = vld [vmem:[%s0 + $0x28] sm:$0xff]
    %v46 = vld [vmem:[%s0 + $0x30] sm:$0xff]
    %v47 = vld [vmem:[%s0 + $0x38] sm:$0xff]
    %v48 = vld [vmem:[%s2] sm:$0xff]
    %v49 = vld [vmem:[%s2 + $0x8] sm:$0xff]
    %v50 = vld [vmem:[%s4] sm:$0x1]
    %v52 = vlaneseq
    %v53 = vshrl.u32 %v52, 7
    %v54 = vsub.s32 0, %v53
    %v55 = vrot.slane %v50, %v54
    %vm57 = vcmask 130048
    %v59 = vsel %vm57, %v40, 0
    %v62 = vsel %vm57, %v41, 0
    %v65 = vsel %vm57, %v42, 0
    %v68 = vsel %vm57, %v43, 0
    %v71 = vsel %vm57, %v44, 0
    %v74 = vsel %vm57, %v45, 0
    %v77 = vsel %vm57, %v46, 0
    %v80 = vsel %vm57, %v47, 0
    %82 = vmatprep.subr.mxu0 0.0
    %83 = vmatpush1.msra.mxu0 %v48
    %84 = vmatprep.subr.mxu0 0.0
    %85 = vmatpush1.msra.mxu0 %v49
    %86 = vmatprep.subr.mxu0 0.0
    %87 = vmatpush1.msra.mxu0 0.0
    %88 = vmatprep.subr.mxu0 0.0
    %89 = vmatpush1.msra.mxu0 0.0
    %90 = vmatprep.subr.mxu0 0.0
    %91 = vmatpush1.msra.mxu0 0.0
    %92 = vmatprep.subr.mxu0 0.0
    %93 = vmatpush1.msra.mxu0 0.0
    %94 = vmatprep.subr.mxu0 0.0
    %95 = vmatpush1.msra.mxu0 0.0
    %96 = vmatprep.subr.mxu0 0.0
    %97 = vmatpush1.msra.mxu0 0.0
    %98 = vmatprep.subr.mxu0 0.0
    %99 = vmatpush1.msra.mxu0 0.0
    %100 = vmatprep.subr.mxu0 0.0
    %101 = vmatpush1.msra.mxu0 0.0
    %102 = vmatprep.subr.mxu0 0.0
    %103 = vmatpush1.msra.mxu0 0.0
    %104 = vmatprep.subr.mxu0 0.0
    %105 = vmatpush1.msra.mxu0 0.0
    %106 = vmatprep.subr.mxu0 0.0
    %107 = vmatpush1.msra.mxu0 0.0
    %108 = vmatprep.subr.mxu0 0.0
    %109 = vmatpush1.msra.mxu0 0.0
    %110 = vmatprep.subr.mxu0 0.0
    %111 = vmatpush1.msra.mxu0 0.0
    %112 = vmatprep.subr.mxu0 0.0
    %113 = vmatpush1.msra.mxu0 0.0
    %114 = vmatprep.subr.mxu0 0.0
    %115 = vmatpush1.msra.mxu0 0.0
    %116 = vmatprep.subr.mxu0 0.0
    %117 = vmatpush1.msra.mxu0 0.0
    %118 = vmatprep.subr.mxu0 0.0
    %119 = vmatpush1.msra.mxu0 0.0
    %120 = vmatprep.subr.mxu0 0.0
    %121 = vmatpush1.msra.mxu0 0.0
    %122 = vmatprep.subr.mxu0 0.0
    %123 = vmatpush1.msra.mxu0 0.0
    %124 = vmatprep.subr.mxu0 0.0
    %125 = vmatpush1.msra.mxu0 0.0
    %126 = vmatprep.subr.mxu0 0.0
    %127 = vmatpush1.msra.mxu0 0.0
    %128 = vmatprep.subr.mxu0 0.0
    %129 = vmatpush1.msra.mxu0 0.0
    %130 = vmatprep.subr.mxu0 0.0
    %131 = vmatpush1.msra.mxu0 0.0
    %132 = vmatprep.subr.mxu0 0.0
    %133 = vmatpush1.msra.mxu0 0.0
    %134 = vmatprep.subr.mxu0 0.0
    %135 = vmatpush1.msra.mxu0 0.0
    %136 = vmatprep.subr.mxu0 0.0
    %137 = vmatpush1.msra.mxu0 0.0
    %138 = vmatprep.subr.mxu0 0.0
    %139 = vmatpush1.msra.mxu0 0.0
    %140 = vmatprep.subr.mxu0 0.0
    %141 = vmatpush1.msra.mxu0 0.0
    %142 = vmatprep.subr.mxu0 0.0
    %143 = vmatpush1.msra.mxu0 0.0
    %144 = vmatprep.subr.mxu0 0.0
    %145 = vmatpush1.msra.mxu0 0.0
    %146 = vmatprep.mubr.f32.mxu0 0.0
    %147 = vmatmul.mubr.f32.gmra.mrb[0].mxu0 %v59
    %v148 = vpop.f32.mrb[0].mxu0
    %v149 = vadd.f32 %v55, %v148
    %v150 = vpop.f32.mrb[0].mxu0
    %151 = vmatprep.mubr.f32.mxu0 0.0
    %152 = vmatmul.mubr.f32.gmra.mrb[0].mxu0 %v62
    %v153 = vpop.f32.mrb[0].mxu0
    %v154 = vadd.f32 %v55, %v153
    %v155 = vpop.f32.mrb[0].mxu0
    %156 = vmatprep.mubr.f32.mxu0 0.0
    %157 = vmatmul.mubr.f32.gmra.mrb[0].mxu0 %v65
    %v158 = vpop.f32.mrb[0].mxu0
    %v159 = vadd.f32 %v55, %v158
    %v160 = vpop.f32.mrb[0].mxu0
    %161 = vmatprep.mubr.f32.mxu0 0.0
    %162 = vmatmul.mubr.f32.gmra.mrb[0].mxu0 %v68
    %v163 = vpop.f32.mrb[0].mxu0
    %v164 = vadd.f32 %v55, %v163
    %v165 = vpop.f32.mrb[0].mxu0
    %166 = vmatprep.mubr.f32.mxu0 0.0
    %167 = vmatmul.mubr.f32.gmra.mrb[0].mxu0 %v71
    %v168 = vpop.f32.mrb[0].mxu0
    %v169 = vadd.f32 %v55, %v168
    %v170 = vpop.f32.mrb[0].mxu0
    %171 = vmatprep.mubr.f32.mxu0 0.0
    %172 = vmatmul.mubr.f32.gmra.mrb[0].mxu0 %v74
    %v173 = vpop.f32.mrb[0].mxu0
    %v174 = vadd.f32 %v55, %v173
    %v175 = vpop.f32.mrb[0].mxu0
    %176 = vmatprep.mubr.f32.mxu0 0.0
    %177 = vmatmul.mubr.f32.gmra.mrb[0].mxu0 %v77
    %v178 = vpop.f32.mrb[0].mxu0
    %v179 = vadd.f32 %v55, %v178
    %v180 = vpop.f32.mrb[0].mxu0
    %181 = vmatprep.mubr.f32.mxu0 0.0
    %182 = vmatmul.mubr.f32.gmra.mrb[0].mxu0 %v80
    %v183 = vpop.f32.mrb[0].mxu0
    %v184 = vadd.f32 %v55, %v183
    %v185 = vpop.f32.mrb[0].mxu0
    %186 = vdwg.mxu0
    %187 = vst [vmem:[#allocation2] sm:$0xff] %v149
    %188 = vst [vmem:[#allocation2 + $0x8] sm:$0xff] %v154
    %189 = vst [vmem:[#allocation2 + $0x10] sm:$0xff] %v159
    %190 = vst [vmem:[#allocation2 + $0x18] sm:$0xff] %v164
    %191 = vst [vmem:[#allocation2 + $0x20] sm:$0xff] %v169
    %192 = vst [vmem:[#allocation2 + $0x28] sm:$0xff] %v174
    %193 = vst [vmem:[#allocation2 + $0x30] sm:$0xff] %v179
    %194 = vst [vmem:[#allocation2 + $0x38] sm:$0xff] %v184
    %v195 = vld [vmem:[%s1] sm:$0xff]
    %v196 = vld [vmem:[#allocation4] sm:$0xff]
    %v197 = vld [vmem:[#allocation4 + $0x8] sm:$0xff]
    %v198 = vld [vmem:[#allocation4 + $0x10] sm:$0xff]
    %v199 = vld [vmem:[#allocation4 + $0x18] sm:$0xff]
    %v200 = vld [vmem:[#allocation2] sm:$0xff]
    %vm201 = vcmask 261120
    %v203 = vsel %vm201, 0.0, 0
    %205 = vmatprep.subr.mxu0 0.0
    %206 = vmatpush1.msra.mxu0 %v196
    %207 = vmatprep.subr.mxu0 0.0
    %208 = vmatpush1.msra.mxu0 %v197
    %209 = vmatprep.subr.mxu0 0.0
    %210 = vmatpush1.msra.mxu0 %v198
    %211 = vmatprep.subr.mxu0 0.0
    %212 = vmatpush1.msra.mxu0 %v199
    %213 = vmatprep.subr.mxu0 0.0
    %214 = vmatpush1.msra.mxu0 0.0
    %215 = vmatprep.subr.mxu0 0.0
    %216 = vmatpush1.msra.mxu0 0.0
    %217 = vmatprep.subr.mxu0 0.0
    %218 = vmatpush1.msra.mxu0 0.0
    %219 = vmatprep.subr.mxu0 0.0
    %220 = vmatpush1.msra.mxu0 0.0
    %221 = vmatprep.subr.mxu0 0.0
    %222 = vmatpush1.msra.mxu0 0.0
    %223 = vmatprep.subr.mxu0 0.0
    %224 = vmatpush1.msra.mxu0 0.0
    %225 = vmatprep.subr.mxu0 0.0
    %226 = vmatpush1.msra.mxu0 0.0
    %227 = vmatprep.subr.mxu0 0.0
    %228 = vmatpush1.msra.mxu0 0.0
    %229 = vmatprep.subr.mxu0 0.0
    %230 = vmatpush1.msra.mxu0 0.0
    %231 = vmatprep.subr.mxu0 0.0
    %232 = vmatpush1.msra.mxu0 0.0
    %233 = vmatprep.subr.mxu0 0.0
    %234 = vmatpush1.msra.mxu0 0.0
    %235 = vmatprep.subr.mxu0 0.0
    %236 = vmatpush1.msra.mxu0 0.0
    %237 = vmatprep.subr.mxu0 0.0
    %238 = vmatpush1.msra.mxu0 0.0
    %239 = vmatprep.subr.mxu0 0.0
    %240 = vmatpush1.msra.mxu0 0.0
    %241 = vmatprep.subr.mxu0 0.0
    %242 = vmatpush1.msra.mxu0 0.0
    %243 = vmatprep.subr.mxu0 0.0
    %244 = vmatpush1.msra.mxu0 0.0
    %245 = vmatprep.subr.mxu0 0.0
    %246 = vmatpush1.msra.mxu0 0.0
    %247 = vmatprep.subr.mxu0 0.0
    %248 = vmatpush1.msra.mxu0 0.0
    %249 = vmatprep.subr.mxu0 0.0
    %250 = vmatpush1.msra.mxu0 0.0
    %251 = vmatprep.subr.mxu0 0.0
    %252 = vmatpush1.msra.mxu0 0.0
    %253 = vmatprep.subr.mxu0 0.0
    %254 = vmatpush1.msra.mxu0 0.0
    %255 = vmatprep.subr.mxu0 0.0
    %256 = vmatpush1.msra.mxu0 0.0
    %257 = vmatprep.subr.mxu0 0.0
    %258 = vmatpush1.msra.mxu0 0.0
    %259 = vmatprep.subr.mxu0 0.0
    %260 = vmatpush1.msra.mxu0 0.0
    %261 = vmatprep.subr.mxu0 0.0
    %262 = vmatpush1.msra.mxu0 0.0
    %263 = vmatprep.subr.mxu0 0.0
    %264 = vmatpush1.msra.mxu0 0.0
    %265 = vmatprep.subr.mxu0 0.0
    %266 = vmatpush1.msra.mxu0 0.0
    %267 = vmatprep.subr.mxu0 0.0
    %268 = vmatpush1.msra.mxu0 0.0
    %269 = vmatprep.mubr.f32.mxu0 0.0
    %270 = vmatmul.mubr.f32.gmra.mrb[0].mxu0 %v203
    %v271 = vpop.f32.mrb[0].mxu0
    %v272 = vadd.f32 0.0, %v271
    %v273 = vpop.f32.mrb[0].mxu0
    %274 = vdwg.mxu0
    %v275 = vadd.f32 %v200, %v272
    %v276 = vxor.u32 %v275, 2147483648
    %v277 = vmul.f32 %v276, 1.442695
    %v278 = vpow.pop %v277
    %v279 = vadd.f32 %v278, 1.0
    %v280 = vrcp.pop %v279
    %v281 = vmul.f32 1.0, %v280
    %v282 = vtanh.pop %v275
    %v283 = vmul.f32 %v281, 0.0
    %285 = vrot.lane.b32.xlu0 %v282, 64
    %v286 = vpop.permute.xlu0 %285
    %v288 = vmul.f32 %v281, %v286
    %290 = vrot.lane.b32.xlu0 %v288, 32
    %v291 = vpop.permute.xlu0 %290
    %v293 = vadd.f32 %v283, %v291
    %v294 = vtanh.pop %v293
    %296 = vrot.lane.b32.xlu0 %v294, 64
    %v297 = vpop.permute.xlu0 %296
    %v299 = vmul.f32 %v281, %v297
    %vm300 = vcmp.gt.s32.totalorder %v195, 0
    %v301 = vsel %vm300, 1, 0
    %302 = vset.pattern.permute.xlu0 0
    %303 = vperm.xlu0 %302, %v301
    %v304 = vpop.permute.xlu0 %303
    %vm305 = vcmp.eq.s32.totalorder %v304, 1
    %v306 = vsel %vm305, %v299, 0.0
    %v307 = vadd.f32 %v306, 0.0
    %s308 = scalar_lea.vmem [#allocation2], 8
    %v309 = vld [vmem:[%s308] sm:$0xff]
    %311 = vrot.lane.b32.xlu0 %v299, 32
    %v312 = vpop.permute.xlu0 %311
    %v313 = vsel %vm201, %v312, 0
    %315 = vmatprep.subr.mxu0 0.0
    %316 = vmatpush1.msra.mxu0 %v196
    %317 = vmatprep.subr.mxu0 0.0
    %318 = vmatpush1.msra.mxu0 %v197
    %319 = vmatprep.subr.mxu0 0.0
    %320 = vmatpush1.msra.mxu0 %v198
    %321 = vmatprep.subr.mxu0 0.0
    %322 = vmatpush1.msra.mxu0 %v199
    %323 = vmatprep.subr.mxu0 0.0
    %324 = vmatpush1.msra.mxu0 0.0
    %325 = vmatprep.subr.mxu0 0.0
    %326 = vmatpush1.msra.mxu0 0.0
    %327 = vmatprep.subr.mxu0 0.0
    %328 = vmatpush1.msra.mxu0 0.0
    %329 = vmatprep.subr.mxu0 0.0
    %330 = vmatpush1.msra.mxu0 0.0
    %331 = vmatprep.subr.mxu0 0.0
    %332 = vmatpush1.msra.mxu0 0.0
    %333 = vmatprep.subr.mxu0 0.0
    %334 = vmatpush1.msra.mxu0 0.0
    %335 = vmatprep.subr.mxu0 0.0
    %336 = vmatpush1.msra.mxu0 0.0
    %337 = vmatprep.subr.mxu0 0.0
    %338 = vmatpush1.msra.mxu0 0.0
    %339 = vmatprep.subr.mxu0 0.0
    %340 = vmatpush1.msra.mxu0 0.0
    %341 = vmatprep.subr.mxu0 0.0
    %342 = vmatpush1.msra.mxu0 0.0
    %343 = vmatprep.subr.mxu0 0.0
    %344 = vmatpush1.msra.mxu0 0.0
    %345 = vmatprep.subr.mxu0 0.0
    %346 = vmatpush1.msra.mxu0 0.0
    %347 = vmatprep.subr.mxu0 0.0
    %348 = vmatpush1.msra.mxu0 0.0
    %349 = vmatprep.subr.mxu0 0.0
    %350 = vmatpush1.msra.mxu0 0.0
    %351 = vmatprep.subr.mxu0 0.0
    %352 = vmatpush1.msra.mxu0 0.0
    %353 = vmatprep.subr.mxu0 0.0
    %354 = vmatpush1.msra.mxu0 0.0
    %355 = vmatprep.subr.mxu0 0.0
    %356 = vmatpush1.msra.mxu0 0.0
    %357 = vmatprep.subr.mxu0 0.0
    %358 = vmatpush1.msra.mxu0 0.0
    %359 = vmatprep.subr.mxu0 0.0
    %360 = vmatpush1.msra.mxu0 0.0
    %361 = vmatprep.subr.mxu0 0.0
    %362 = vmatpush1.msra.mxu0 0.0
    %363 = vmatprep.subr.mxu0 0.0
    %364 = vmatpush1.msra.mxu0 0.0
    %365 = vmatprep.subr.mxu0 0.0
    %366 = vmatpush1.msra.mxu0 0.0
    %367 = vmatprep.subr.mxu0 0.0
    %368 = vmatpush1.msra.mxu0 0.0
    %369 = vmatprep.subr.mxu0 0.0
    %370 = vmatpush1.msra.mxu0 0.0
    %371 = vmatprep.subr.mxu0 0.0
    %372 = vmatpush1.msra.mxu0 0.0
    %373 = vmatprep.subr.mxu0 0.0
    %374 = vmatpush1.msra.mxu0 0.0
    %375 = vmatprep.subr.mxu0 0.0
    %376 = vmatpush1.msra.mxu0 0.0
    %377 = vmatprep.subr.mxu0 0.0
    %378 = vmatpush1.msra.mxu0 0.0
    %379 = vmatprep.mubr.f32.mxu0 0.0
    %380 = vmatmul.mubr.f32.gmra.mrb[0].mxu0 %v313
    %v381 = vpop.f32.mrb[0].mxu0
    %v382 = vadd.f32 0.0, %v381
    %v383 = vpop.f32.mrb[0].mxu0
    %384 = vdwg.mxu0
    %v385 = vadd.f32 %v309, %v382
    %v386 = vxor.u32 %v385, 2147483648
    %v387 = vmul.f32 %v386, 1.442695
    %v388 = vpow.pop %v387
    %v389 = vadd.f32 %v388, 1.0
    %v390 = vrcp.pop %v389
    %v391 = vmul.f32 1.0, %v390
    %v392 = vtanh.pop %v385
    %v393 = vmul.f32 %v391, %v293
    %395 = vrot.lane.b32.xlu0 %v392, 64
    %v396 = vpop.permute.xlu0 %395
    %v398 = vmul.f32 %v391, %v396
    %400 = vrot.lane.b32.xlu0 %v398, 32
    %v401 = vpop.permute.xlu0 %400
    %v403 = vadd.f32 %v393, %v401
    %v404 = vtanh.pop %v403
    %406 = vrot.lane.b32.xlu0 %v404, 64
    %v407 = vpop.permute.xlu0 %406
    %v409 = vmul.f32 %v391, %v407
    %vm410 = vcmp.gt.s32.totalorder %v195, 1
    %v411 = vsel %vm410, 1, 0
    %412 = vset.pattern.permute.xlu0 0
    %413 = vperm.xlu0 %412, %v411
    %v414 = vpop.permute.xlu0 %413
    %vm415 = vcmp.eq.s32.totalorder %v414, 1
    %v416 = vsel %vm415, %v409, 0.0
    %v417 = vadd.f32 %v307, %v416
    %v418 = vmax.f32 %v306, %v416
    %s419 = scalar_lea.vmem [#allocation2], 16
    %v420 = vld [vmem:[%s419] sm:$0xff]
    %422 = vrot.lane.b32.xlu0 %v409, 32
    %v423 = vpop.permute.xlu0 %422
    %v424 = vsel %vm201, %v423, 0
    %426 = vmatprep.subr.mxu0 0.0
    %427 = vmatpush1.msra.mxu0 %v196
    %428 = vmatprep.subr.mxu0 0.0
    %429 = vmatpush1.msra.mxu0 %v197
    %430 = vmatprep.subr.mxu0 0.0
    %431 = vmatpush1.msra.mxu0 %v198
    %432 = vmatprep.subr.mxu0 0.0
    %433 = vmatpush1.msra.mxu0 %v199
    %434 = vmatprep.subr.mxu0 0.0
    %435 = vmatpush1.msra.mxu0 0.0
    %436 = vmatprep.subr.mxu0 0.0
    %437 = vmatpush1.msra.mxu0 0.0
    %438 = vmatprep.subr.mxu0 0.0
    %439 = vmatpush1.msra.mxu0 0.0
    %440 = vmatprep.subr.mxu0 0.0
    %441 = vmatpush1.msra.mxu0 0.0
    %442 = vmatprep.subr.mxu0 0.0
    %443 = vmatpush1.msra.mxu0 0.0
    %444 = vmatprep.subr.mxu0 0.0
    %445 = vmatpush1.msra.mxu0 0.0
    %446 = vmatprep.subr.mxu0 0.0
    %447 = vmatpush1.msra.mxu0 0.0
    %448 = vmatprep.subr.mxu0 0.0
    %449 = vmatpush1.msra.mxu0 0.0
    %450 = vmatprep.subr.mxu0 0.0
    %451 = vmatpush1.msra.mxu0 0.0
    %452 = vmatprep.subr.mxu0 0.0
    %453 = vmatpush1.msra.mxu0 0.0
    %454 = vmatprep.subr.mxu0 0.0
    %455 = vmatpush1.msra.mxu0 0.0
    %456 = vmatprep.subr.mxu0 0.0
    %457 = vmatpush1.msra.mxu0 0.0
    %458 = vmatprep.subr.mxu0 0.0
    %459 = vmatpush1.msra.mxu0 0.0
    %460 = vmatprep.subr.mxu0 0.0
    %461 = vmatpush1.msra.mxu0 0.0
    %462 = vmatprep.subr.mxu0 0.0
    %463 = vmatpush1.msra.mxu0 0.0
    %464 = vmatprep.subr.mxu0 0.0
    %465 = vmatpush1.msra.mxu0 0.0
    %466 = vmatprep.subr.mxu0 0.0
    %467 = vmatpush1.msra.mxu0 0.0
    %468 = vmatprep.subr.mxu0 0.0
    %469 = vmatpush1.msra.mxu0 0.0
    %470 = vmatprep.subr.mxu0 0.0
    %471 = vmatpush1.msra.mxu0 0.0
    %472 = vmatprep.subr.mxu0 0.0
    %473 = vmatpush1.msra.mxu0 0.0
    %474 = vmatprep.subr.mxu0 0.0
    %475 = vmatpush1.msra.mxu0 0.0
    %476 = vmatprep.subr.mxu0 0.0
    %477 = vmatpush1.msra.mxu0 0.0
    %478 = vmatprep.subr.mxu0 0.0
    %479 = vmatpush1.msra.mxu0 0.0
    %480 = vmatprep.subr.mxu0 0.0
    %481 = vmatpush1.msra.mxu0 0.0
    %482 = vmatprep.subr.mxu0 0.0
    %483 = vmatpush1.msra.mxu0 0.0
    %484 = vmatprep.subr.mxu0 0.0
    %485 = vmatpush1.msra.mxu0 0.0
    %486 = vmatprep.subr.mxu0 0.0
    %487 = vmatpush1.msra.mxu0 0.0
    %488 = vmatprep.subr.mxu0 0.0
    %489 = vmatpush1.msra.mxu0 0.0
    %490 = vmatprep.mubr.f32.mxu0 0.0
    %491 = vmatmul.mubr.f32.gmra.mrb[0].mxu0 %v424
    %v492 = vpop.f32.mrb[0].mxu0
    %v493 = vadd.f32 0.0, %v492
    %v494 = vpop.f32.mrb[0].mxu0
    %495 = vdwg.mxu0
    %v496 = vadd.f32 %v420, %v493
    %v497 = vxor.u32 %v496, 2147483648
    %v498 = vmul.f32 %v497, 1.442695
    %v499 = vpow.pop %v498
    %v500 = vadd.f32 %v499, 1.0
    %v501 = vrcp.pop %v500
    %v502 = vmul.f32 1.0, %v501
    %v503 = vtanh.pop %v496
    %v504 = vmul.f32 %v502, %v403
    %506 = vrot.lane.b32.xlu0 %v503, 64
    %v507 = vpop.permute.xlu0 %506
    %v509 = vmul.f32 %v502, %v507
    %511 = vrot.lane.b32.xlu0 %v509, 32
    %v512 = vpop.permute.xlu0 %511
    %v514 = vadd.f32 %v504, %v512
    %v515 = vtanh.pop %v514
    %517 = vrot.lane.b32.xlu0 %v515, 64
    %v518 = vpop.permute.xlu0 %517
    %v520 = vmul.f32 %v502, %v518
    %vm521 = vcmp.gt.s32.totalorder %v195, 2
    %v522 = vsel %vm521, 1, 0
    %523 = vset.pattern.permute.xlu0 0
    %524 = vperm.xlu0 %523, %v522
    %v525 = vpop.permute.xlu0 %524
    %vm526 = vcmp.eq.s32.totalorder %v525, 1
    %v527 = vsel %vm526, %v520, 0.0
    %v528 = vadd.f32 %v417, %v527
    %v529 = vmax.f32 %v418, %v527
    %s530 = scalar_lea.vmem [#allocation2], 24
    %v531 = vld [vmem:[%s530] sm:$0xff]
    %533 = vrot.lane.b32.xlu0 %v520, 32
    %v534 = vpop.permute.xlu0 %533
    %v535 = vsel %vm201, %v534, 0
    %537 = vmatprep.subr.mxu0 0.0
    %538 = vmatpush1.msra.mxu0 %v196
    %539 = vmatprep.subr.mxu0 0.0
    %540 = vmatpush1.msra.mxu0 %v197
    %541 = vmatprep.subr.mxu0 0.0
    %542 = vmatpush1.msra.mxu0 %v198
    %543 = vmatprep.subr.mxu0 0.0
    %544 = vmatpush1.msra.mxu0 %v199
    %545 = vmatprep.subr.mxu0 0.0
    %546 = vmatpush1.msra.mxu0 0.0
    %547 = vmatprep.subr.mxu0 0.0
    %548 = vmatpush1.msra.mxu0 0.0
    %549 = vmatprep.subr.mxu0 0.0
    %550 = vmatpush1.msra.mxu0 0.0
    %551 = vmatprep.subr.mxu0 0.0
    %552 = vmatpush1.msra.mxu0 0.0
    %553 = vmatprep.subr.mxu0 0.0
    %554 = vmatpush1.msra.mxu0 0.0
    %555 = vmatprep.subr.mxu0 0.0
    %556 = vmatpush1.msra.mxu0 0.0
    %557 = vmatprep.subr.mxu0 0.0
    %558 = vmatpush1.msra.mxu0 0.0
    %559 = vmatprep.subr.mxu0 0.0
    %560 = vmatpush1.msra.mxu0 0.0
    %561 = vmatprep.subr.mxu0 0.0
    %562 = vmatpush1.msra.mxu0 0.0
    %563 = vmatprep.subr.mxu0 0.0
    %564 = vmatpush1.msra.mxu0 0.0
    %565 = vmatprep.subr.mxu0 0.0
    %566 = vmatpush1.msra.mxu0 0.0
    %567 = vmatprep.subr.mxu0 0.0
    %568 = vmatpush1.msra.mxu0 0.0
    %569 = vmatprep.subr.mxu0 0.0
    %570 = vmatpush1.msra.mxu0 0.0
    %571 = vmatprep.subr.mxu0 0.0
    %572 = vmatpush1.msra.mxu0 0.0
    %573 = vmatprep.subr.mxu0 0.0
    %574 = vmatpush1.msra.mxu0 0.0
    %575 = vmatprep.subr.mxu0 0.0
    %576 = vmatpush1.msra.mxu0 0.0
    %577 = vmatprep.subr.mxu0 0.0
    %578 = vmatpush1.msra.mxu0 0.0
    %579 = vmatprep.subr.mxu0 0.0
    %580 = vmatpush1.msra.mxu0 0.0
    %581 = vmatprep.subr.mxu0 0.0
    %582 = vmatpush1.msra.mxu0 0.0
    %583 = vmatprep.subr.mxu0 0.0
    %584 = vmatpush1.msra.mxu0 0.0
    %585 = vmatprep.subr.mxu0 0.0
    %586 = vmatpush1.msra.mxu0 0.0
    %587 = vmatprep.subr.mxu0 0.0
    %588 = vmatpush1.msra.mxu0 0.0
    %589 = vmatprep.subr.mxu0 0.0
    %590 = vmatpush1.msra.mxu0 0.0
    %591 = vmatprep.subr.mxu0 0.0
    %592 = vmatpush1.msra.mxu0 0.0
    %593 = vmatprep.subr.mxu0 0.0
    %594 = vmatpush1.msra.mxu0 0.0
    %595 = vmatprep.subr.mxu0 0.0
    %596 = vmatpush1.msra.mxu0 0.0
    %597 = vmatprep.subr.mxu0 0.0
    %598 = vmatpush1.msra.mxu0 0.0
    %599 = vmatprep.subr.mxu0 0.0
    %600 = vmatpush1.msra.mxu0 0.0
    %601 = vmatprep.mubr.f32.mxu0 0.0
    %602 = vmatmul.mubr.f32.gmra.mrb[0].mxu0 %v535
    %v603 = vpop.f32.mrb[0].mxu0
    %v604 = vadd.f32 0.0, %v603
    %v605 = vpop.f32.mrb[0].mxu0
    %606 = vdwg.mxu0
    %v607 = vadd.f32 %v531, %v604
    %v608 = vxor.u32 %v607, 2147483648
    %v609 = vmul.f32 %v608, 1.442695
    %v610 = vpow.pop %v609
    %v611 = vadd.f32 %v610, 1.0
    %v612 = vrcp.pop %v611
    %v613 = vmul.f32 1.0, %v612
    %v614 = vtanh.pop %v607
    %v615 = vmul.f32 %v613, %v514
    %617 = vrot.lane.b32.xlu0 %v614, 64
    %v618 = vpop.permute.xlu0 %617
    %v620 = vmul.f32 %v613, %v618
    %622 = vrot.lane.b32.xlu0 %v620, 32
    %v623 = vpop.permute.xlu0 %622
    %v625 = vadd.f32 %v615, %v623
    %v626 = vtanh.pop %v625
    %628 = vrot.lane.b32.xlu0 %v626, 64
    %v629 = vpop.permute.xlu0 %628
    %v631 = vmul.f32 %v613, %v629
    %vm632 = vcmp.gt.s32.totalorder %v195, 3
    %v633 = vsel %vm632, 1, 0
    %634 = vset.pattern.permute.xlu0 0
    %635 = vperm.xlu0 %634, %v633
    %v636 = vpop.permute.xlu0 %635
    %vm637 = vcmp.eq.s32.totalorder %v636, 1
    %v638 = vsel %vm637, %v631, 0.0
    %v639 = vadd.f32 %v528, %v638
    %v640 = vmax.f32 %v529, %v638
    %s641 = scalar_lea.vmem [#allocation2], 32
    %v642 = vld [vmem:[%s641] sm:$0xff]
    %644 = vrot.lane.b32.xlu0 %v631, 32
    %v645 = vpop.permute.xlu0 %644
    %v646 = vsel %vm201, %v645, 0
    %648 = vmatprep.subr.mxu0 0.0
    %649 = vmatpush1.msra.mxu0 %v196
    %650 = vmatprep.subr.mxu0 0.0
    %651 = vmatpush1.msra.mxu0 %v197
    %652 = vmatprep.subr.mxu0 0.0
    %653 = vmatpush1.msra.mxu0 %v198
    %654 = vmatprep.subr.mxu0 0.0
    %655 = vmatpush1.msra.mxu0 %v199
    %656 = vmatprep.subr.mxu0 0.0
    %657 = vmatpush1.msra.mxu0 0.0
    %658 = vmatprep.subr.mxu0 0.0
    %659 = vmatpush1.msra.mxu0 0.0
    %660 = vmatprep.subr.mxu0 0.0
    %661 = vmatpush1.msra.mxu0 0.0
    %662 = vmatprep.subr.mxu0 0.0
    %663 = vmatpush1.msra.mxu0 0.0
    %664 = vmatprep.subr.mxu0 0.0
    %665 = vmatpush1.msra.mxu0 0.0
    %666 = vmatprep.subr.mxu0 0.0
    %667 = vmatpush1.msra.mxu0 0.0
    %668 = vmatprep.subr.mxu0 0.0
    %669 = vmatpush1.msra.mxu0 0.0
    %670 = vmatprep.subr.mxu0 0.0
    %671 = vmatpush1.msra.mxu0 0.0
    %672 = vmatprep.subr.mxu0 0.0
    %673 = vmatpush1.msra.mxu0 0.0
    %674 = vmatprep.subr.mxu0 0.0
    %675 = vmatpush1.msra.mxu0 0.0
    %676 = vmatprep.subr.mxu0 0.0
    %677 = vmatpush1.msra.mxu0 0.0
    %678 = vmatprep.subr.mxu0 0.0
    %679 = vmatpush1.msra.mxu0 0.0
    %680 = vmatprep.subr.mxu0 0.0
    %681 = vmatpush1.msra.mxu0 0.0
    %682 = vmatprep.subr.mxu0 0.0
    %683 = vmatpush1.msra.mxu0 0.0
    %684 = vmatprep.subr.mxu0 0.0
    %685 = vmatpush1.msra.mxu0 0.0
    %686 = vmatprep.subr.mxu0 0.0
    %687 = vmatpush1.msra.mxu0 0.0
    %688 = vmatprep.subr.mxu0 0.0
    %689 = vmatpush1.msra.mxu0 0.0
    %690 = vmatprep.subr.mxu0 0.0
    %691 = vmatpush1.msra.mxu0 0.0
    %692 = vmatprep.subr.mxu0 0.0
    %693 = vmatpush1.msra.mxu0 0.0
    %694 = vmatprep.subr.mxu0 0.0
    %695 = vmatpush1.msra.mxu0 0.0
    %696 = vmatprep.subr.mxu0 0.0
    %697 = vmatpush1.msra.mxu0 0.0
    %698 = vmatprep.subr.mxu0 0.0
    %699 = vmatpush1.msra.mxu0 0.0
    %700 = vmatprep.subr.mxu0 0.0
    %701 = vmatpush1.msra.mxu0 0.0
    %702 = vmatprep.subr.mxu0 0.0
    %703 = vmatpush1.msra.mxu0 0.0
    %704 = vmatprep.subr.mxu0 0.0
    %705 = vmatpush1.msra.mxu0 0.0
    %706 = vmatprep.subr.mxu0 0.0
    %707 = vmatpush1.msra.mxu0 0.0
    %708 = vmatprep.subr.mxu0 0.0
    %709 = vmatpush1.msra.mxu0 0.0
    %710 = vmatprep.subr.mxu0 0.0
    %711 = vmatpush1.msra.mxu0 0.0
    %712 = vmatprep.mubr.f32.mxu0 0.0
    %713 = vmatmul.mubr.f32.gmra.mrb[0].mxu0 %v646
    %v714 = vpop.f32.mrb[0].mxu0
    %v715 = vadd.f32 0.0, %v714
    %v716 = vpop.f32.mrb[0].mxu0
    %717 = vdwg.mxu0
    %v718 = vadd.f32 %v642, %v715
    %v719 = vxor.u32 %v718, 2147483648
    %v720 = vmul.f32 %v719, 1.442695
    %v721 = vpow.pop %v720
    %v722 = vadd.f32 %v721, 1.0
    %v723 = vrcp.pop %v722
    %v724 = vmul.f32 1.0, %v723
    %v725 = vtanh.pop %v718
    %v726 = vmul.f32 %v724, %v625
    %728 = vrot.lane.b32.xlu0 %v725, 64
    %v729 = vpop.permute.xlu0 %728
    %v731 = vmul.f32 %v724, %v729
    %733 = vrot.lane.b32.xlu0 %v731, 32
    %v734 = vpop.permute.xlu0 %733
    %v736 = vadd.f32 %v726, %v734
    %v737 = vtanh.pop %v736
    %739 = vrot.lane.b32.xlu0 %v737, 64
    %v740 = vpop.permute.xlu0 %739
    %v742 = vmul.f32 %v724, %v740
    %vm743 = vcmp.gt.s32.totalorder %v195, 4
    %v744 = vsel %vm743, 1, 0
    %745 = vset.pattern.permute.xlu0 0
    %746 = vperm.xlu0 %745, %v744
    %v747 = vpop.permute.xlu0 %746
    %vm748 = vcmp.eq.s32.totalorder %v747, 1
    %v749 = vsel %vm748, %v742, 0.0
    %v750 = vadd.f32 %v639, %v749
    %v751 = vmax.f32 %v640, %v749
    %s752 = scalar_lea.vmem [#allocation2], 40
    %v753 = vld [vmem:[%s752] sm:$0xff]
    %755 = vrot.lane.b32.xlu0 %v742, 32
    %v756 = vpop.permute.xlu0 %755
    %v757 = vsel %vm201, %v756, 0
    %759 = vmatprep.subr.mxu0 0.0
    %760 = vmatpush1.msra.mxu0 %v196
    %761 = vmatprep.subr.mxu0 0.0
    %762 = vmatpush1.msra.mxu0 %v197
    %763 = vmatprep.subr.mxu0 0.0
    %764 = vmatpush1.msra.mxu0 %v198
    %765 = vmatprep.subr.mxu0 0.0
    %766 = vmatpush1.msra.mxu0 %v199
    %767 = vmatprep.subr.mxu0 0.0
    %768 = vmatpush1.msra.mxu0 0.0
    %769 = vmatprep.subr.mxu0 0.0
    %770 = vmatpush1.msra.mxu0 0.0
    %771 = vmatprep.subr.mxu0 0.0
    %772 = vmatpush1.msra.mxu0 0.0
    %773 = vmatprep.subr.mxu0 0.0
    %774 = vmatpush1.msra.mxu0 0.0
    %775 = vmatprep.subr.mxu0 0.0
    %776 = vmatpush1.msra.mxu0 0.0
    %777 = vmatprep.subr.mxu0 0.0
    %778 = vmatpush1.msra.mxu0 0.0
    %779 = vmatprep.subr.mxu0 0.0
    %780 = vmatpush1.msra.mxu0 0.0
    %781 = vmatprep.subr.mxu0 0.0
    %782 = vmatpush1.msra.mxu0 0.0
    %783 = vmatprep.subr.mxu0 0.0
    %784 = vmatpush1.msra.mxu0 0.0
    %785 = vmatprep.subr.mxu0 0.0
    %786 = vmatpush1.msra.mxu0 0.0
    %787 = vmatprep.subr.mxu0 0.0
    %788 = vmatpush1.msra.mxu0 0.0
    %789 = vmatprep.subr.mxu0 0.0
    %790 = vmatpush1.msra.mxu0 0.0
    %791 = vmatprep.subr.mxu0 0.0
    %792 = vmatpush1.msra.mxu0 0.0
    %793 = vmatprep.subr.mxu0 0.0
    %794 = vmatpush1.msra.mxu0 0.0
    %795 = vmatprep.subr.mxu0 0.0
    %796 = vmatpush1.msra.mxu0 0.0
    %797 = vmatprep.subr.mxu0 0.0
    %798 = vmatpush1.msra.mxu0 0.0
    %799 = vmatprep.subr.mxu0 0.0
    %800 = vmatpush1.msra.mxu0 0.0
    %801 = vmatprep.subr.mxu0 0.0
    %802 = vmatpush1.msra.mxu0 0.0
    %803 = vmatprep.subr.mxu0 0.0
    %804 = vmatpush1.msra.mxu0 0.0
    %805 = vmatprep.subr.mxu0 0.0
    %806 = vmatpush1.msra.mxu0 0.0
    %807 = vmatprep.subr.mxu0 0.0
    %808 = vmatpush1.msra.mxu0 0.0
    %809 = vmatprep.subr.mxu0 0.0
    %810 = vmatpush1.msra.mxu0 0.0
    %811 = vmatprep.subr.mxu0 0.0
    %812 = vmatpush1.msra.mxu0 0.0
    %813 = vmatprep.subr.mxu0 0.0
    %814 = vmatpush1.msra.mxu0 0.0
    %815 = vmatprep.subr.mxu0 0.0
    %816 = vmatpush1.msra.mxu0 0.0
    %817 = vmatprep.subr.mxu0 0.0
    %818 = vmatpush1.msra.mxu0 0.0
    %819 = vmatprep.subr.mxu0 0.0
    %820 = vmatpush1.msra.mxu0 0.0
    %821 = vmatprep.subr.mxu0 0.0
    %822 = vmatpush1.msra.mxu0 0.0
    %823 = vmatprep.mubr.f32.mxu0 0.0
    %824 = vmatmul.mubr.f32.gmra.mrb[0].mxu0 %v757
    %v825 = vpop.f32.mrb[0].mxu0
    %v826 = vadd.f32 0.0, %v825
    %v827 = vpop.f32.mrb[0].mxu0
    %828 = vdwg.mxu0
    %v829 = vadd.f32 %v753, %v826
    %v830 = vxor.u32 %v829, 2147483648
    %v831 = vmul.f32 %v830, 1.442695
    %v832 = vpow.pop %v831
    %v833 = vadd.f32 %v832, 1.0
    %v834 = vrcp.pop %v833
    %v835 = vmul.f32 1.0, %v834
    %v836 = vtanh.pop %v829
    %v837 = vmul.f32 %v835, %v736
    %839 = vrot.lane.b32.xlu0 %v836, 64
    %v840 = vpop.permute.xlu0 %839
    %v842 = vmul.f32 %v835, %v840
    %844 = vrot.lane.b32.xlu0 %v842, 32
    %v845 = vpop.permute.xlu0 %844
    %v847 = vadd.f32 %v837, %v845
    %v848 = vtanh.pop %v847
    %850 = vrot.lane.b32.xlu0 %v848, 64
    %v851 = vpop.permute.xlu0 %850
    %v853 = vmul.f32 %v835, %v851
    %vm854 = vcmp.gt.s32.totalorder %v195, 5
    %v855 = vsel %vm854, 1, 0
    %856 = vset.pattern.permute.xlu0 0
    %857 = vperm.xlu0 %856, %v855
    %v858 = vpop.permute.xlu0 %857
    %vm859 = vcmp.eq.s32.totalorder %v858, 1
    %v860 = vsel %vm859, %v853, 0.0
    %v861 = vadd.f32 %v750, %v860
    %v862 = vmax.f32 %v751, %v860
    %s863 = scalar_lea.vmem [#allocation2], 48
    %v864 = vld [vmem:[%s863] sm:$0xff]
    %866 = vrot.lane.b32.xlu0 %v853, 32
    %v867 = vpop.permute.xlu0 %866
    %v868 = vsel %vm201, %v867, 0
    %870 = vmatprep.subr.mxu0 0.0
    %871 = vmatpush1.msra.mxu0 %v196
    %872 = vmatprep.subr.mxu0 0.0
    %873 = vmatpush1.msra.mxu0 %v197
    %874 = vmatprep.subr.mxu0 0.0
    %875 = vmatpush1.msra.mxu0 %v198
    %876 = vmatprep.subr.mxu0 0.0
    %877 = vmatpush1.msra.mxu0 %v199
    %878 = vmatprep.subr.mxu0 0.0
    %879 = vmatpush1.msra.mxu0 0.0
    %880 = vmatprep.subr.mxu0 0.0
    %881 = vmatpush1.msra.mxu0 0.0
    %882 = vmatprep.subr.mxu0 0.0
    %883 = vmatpush1.msra.mxu0 0.0
    %884 = vmatprep.subr.mxu0 0.0
    %885 = vmatpush1.msra.mxu0 0.0
    %886 = vmatprep.subr.mxu0 0.0
    %887 = vmatpush1.msra.mxu0 0.0
    %888 = vmatprep.subr.mxu0 0.0
    %889 = vmatpush1.msra.mxu0 0.0
    %890 = vmatprep.subr.mxu0 0.0
    %891 = vmatpush1.msra.mxu0 0.0
    %892 = vmatprep.subr.mxu0 0.0
    %893 = vmatpush1.msra.mxu0 0.0
    %894 = vmatprep.subr.mxu0 0.0
    %895 = vmatpush1.msra.mxu0 0.0
    %896 = vmatprep.subr.mxu0 0.0
    %897 = vmatpush1.msra.mxu0 0.0
    %898 = vmatprep.subr.mxu0 0.0
    %899 = vmatpush1.msra.mxu0 0.0
    %900 = vmatprep.subr.mxu0 0.0
    %901 = vmatpush1.msra.mxu0 0.0
    %902 = vmatprep.subr.mxu0 0.0
    %903 = vmatpush1.msra.mxu0 0.0
    %904 = vmatprep.subr.mxu0 0.0
    %905 = vmatpush1.msra.mxu0 0.0
    %906 = vmatprep.subr.mxu0 0.0
    %907 = vmatpush1.msra.mxu0 0.0
    %908 = vmatprep.subr.mxu0 0.0
    %909 = vmatpush1.msra.mxu0 0.0
    %910 = vmatprep.subr.mxu0 0.0
    %911 = vmatpush1.msra.mxu0 0.0
    %912 = vmatprep.subr.mxu0 0.0
    %913 = vmatpush1.msra.mxu0 0.0
    %914 = vmatprep.subr.mxu0 0.0
    %915 = vmatpush1.msra.mxu0 0.0
    %916 = vmatprep.subr.mxu0 0.0
    %917 = vmatpush1.msra.mxu0 0.0
    %918 = vmatprep.subr.mxu0 0.0
    %919 = vmatpush1.msra.mxu0 0.0
    %920 = vmatprep.subr.mxu0 0.0
    %921 = vmatpush1.msra.mxu0 0.0
    %922 = vmatprep.subr.mxu0 0.0
    %923 = vmatpush1.msra.mxu0 0.0
    %924 = vmatprep.subr.mxu0 0.0
    %925 = vmatpush1.msra.mxu0 0.0
    %926 = vmatprep.subr.mxu0 0.0
    %927 = vmatpush1.msra.mxu0 0.0
    %928 = vmatprep.subr.mxu0 0.0
    %929 = vmatpush1.msra.mxu0 0.0
    %930 = vmatprep.subr.mxu0 0.0
    %931 = vmatpush1.msra.mxu0 0.0
    %932 = vmatprep.subr.mxu0 0.0
    %933 = vmatpush1.msra.mxu0 0.0
    %934 = vmatprep.mubr.f32.mxu0 0.0
    %935 = vmatmul.mubr.f32.gmra.mrb[0].mxu0 %v868
    %v936 = vpop.f32.mrb[0].mxu0
    %v937 = vadd.f32 0.0, %v936
    %v938 = vpop.f32.mrb[0].mxu0
    %939 = vdwg.mxu0
    %v940 = vadd.f32 %v864, %v937
    %v941 = vxor.u32 %v940, 2147483648
    %v942 = vmul.f32 %v941, 1.442695
    %v943 = vpow.pop %v942
    %v944 = vadd.f32 %v943, 1.0
    %v945 = vrcp.pop %v944
    %v946 = vmul.f32 1.0, %v945
    %v947 = vtanh.pop %v940
    %v948 = vmul.f32 %v946, %v847
    %950 = vrot.lane.b32.xlu0 %v947, 64
    %v951 = vpop.permute.xlu0 %950
    %v953 = vmul.f32 %v946, %v951
    %955 = vrot.lane.b32.xlu0 %v953, 32
    %v956 = vpop.permute.xlu0 %955
    %v958 = vadd.f32 %v948, %v956
    %v959 = vtanh.pop %v958
    %961 = vrot.lane.b32.xlu0 %v959, 64
    %v962 = vpop.permute.xlu0 %961
    %v964 = vmul.f32 %v946, %v962
    %vm965 = vcmp.gt.s32.totalorder %v195, 6
    %v966 = vsel %vm965, 1, 0
    %967 = vset.pattern.permute.xlu0 0
    %968 = vperm.xlu0 %967, %v966
    %v969 = vpop.permute.xlu0 %968
    %vm970 = vcmp.eq.s32.totalorder %v969, 1
    %v971 = vsel %vm970, %v964, 0.0
    %v972 = vadd.f32 %v861, %v971
    %v973 = vmax.f32 %v862, %v971
    %s974 = scalar_lea.vmem [#allocation2], 56
    %v975 = vld [vmem:[%s974] sm:$0xff]
    %977 = vrot.lane.b32.xlu0 %v964, 32
    %v978 = vpop.permute.xlu0 %977
    %v979 = vsel %vm201, %v978, 0
    %981 = vmatprep.subr.mxu0 0.0
    %982 = vmatpush1.msra.mxu0 %v196
    %983 = vmatprep.subr.mxu0 0.0
    %984 = vmatpush1.msra.mxu0 %v197
    %985 = vmatprep.subr.mxu0 0.0
    %986 = vmatpush1.msra.mxu0 %v198
    %987 = vmatprep.subr.mxu0 0.0
    %988 = vmatpush1.msra.mxu0 %v199
    %989 = vmatprep.subr.mxu0 0.0
    %990 = vmatpush1.msra.mxu0 0.0
    %991 = vmatprep.subr.mxu0 0.0
    %992 = vmatpush1.msra.mxu0 0.0
    %993 = vmatprep.subr.mxu0 0.0
    %994 = vmatpush1.msra.mxu0 0.0
    %995 = vmatprep.subr.mxu0 0.0
    %996 = vmatpush1.msra.mxu0 0.0
    %997 = vmatprep.subr.mxu0 0.0
    %998 = vmatpush1.msra.mxu0 0.0
    %999 = vmatprep.subr.mxu0 0.0
    %1000 = vmatpush1.msra.mxu0 0.0
    %1001 = vmatprep.subr.mxu0 0.0
    %1002 = vmatpush1.msra.mxu0 0.0
    %1003 = vmatprep.subr.mxu0 0.0
    %1004 = vmatpush1.msra.mxu0 0.0
    %1005 = vmatprep.subr.mxu0 0.0
    %1006 = vmatpush1.msra.mxu0 0.0
    %1007 = vmatprep.subr.mxu0 0.0
    %1008 = vmatpush1.msra.mxu0 0.0
    %1009 = vmatprep.subr.mxu0 0.0
    %1010 = vmatpush1.msra.mxu0 0.0
    %1011 = vmatprep.subr.mxu0 0.0
    %1012 = vmatpush1.msra.mxu0 0.0
    %1013 = vmatprep.subr.mxu0 0.0
    %1014 = vmatpush1.msra.mxu0 0.0
    %1015 = vmatprep.subr.mxu0 0.0
    %1016 = vmatpush1.msra.mxu0 0.0
    %1017 = vmatprep.subr.mxu0 0.0
    %1018 = vmatpush1.msra.mxu0 0.0
    %1019 = vmatprep.subr.mxu0 0.0
    %1020 = vmatpush1.msra.mxu0 0.0
    %1021 = vmatprep.subr.mxu0 0.0
    %1022 = vmatpush1.msra.mxu0 0.0
    %1023 = vmatprep.subr.mxu0 0.0
    %1024 = vmatpush1.msra.mxu0 0.0
    %1025 = vmatprep.subr.mxu0 0.0
    %1026 = vmatpush1.msra.mxu0 0.0
    %1027 = vmatprep.subr.mxu0 0.0
    %1028 = vmatpush1.msra.mxu0 0.0
    %1029 = vmatprep.subr.mxu0 0.0
    %1030 = vmatpush1.msra.mxu0 0.0
    %1031 = vmatprep.subr.mxu0 0.0
    %1032 = vmatpush1.msra.mxu0 0.0
    %1033 = vmatprep.subr.mxu0 0.0
    %1034 = vmatpush1.msra.mxu0 0.0
    %1035 = vmatprep.subr.mxu0 0.0
    %1036 = vmatpush1.msra.mxu0 0.0
    %1037 = vmatprep.subr.mxu0 0.0
    %1038 = vmatpush1.msra.mxu0 0.0
    %1039 = vmatprep.subr.mxu0 0.0
    %1040 = vmatpush1.msra.mxu0 0.0
    %1041 = vmatprep.subr.mxu0 0.0
    %1042 = vmatpush1.msra.mxu0 0.0
    %1043 = vmatprep.subr.mxu0 0.0
    %1044 = vmatpush1.msra.mxu0 0.0
    %1045 = vmatprep.mubr.f32.mxu0 0.0
    %1046 = vmatmul.mubr.f32.gmra.mrb[0].mxu0 %v979
    %v1047 = vpop.f32.mrb[0].mxu0
    %v1048 = vadd.f32 0.0, %v1047
    %v1049 = vpop.f32.mrb[0].mxu0
    %1050 = vdwg.mxu0
    %v1051 = vadd.f32 %v975, %v1048
    %v1052 = vxor.u32 %v1051, 2147483648
    %v1053 = vmul.f32 %v1052, 1.442695
    %v1054 = vpow.pop %v1053
    %v1055 = vadd.f32 %v1054, 1.0
    %v1056 = vrcp.pop %v1055
    %v1057 = vmul.f32 1.0, %v1056
    %v1058 = vtanh.pop %v1051
    %v1059 = vmul.f32 %v1057, %v958
    %1061 = vrot.lane.b32.xlu0 %v1058, 64
    %v1062 = vpop.permute.xlu0 %1061
    %v1064 = vmul.f32 %v1057, %v1062
    %1066 = vrot.lane.b32.xlu0 %v1064, 32
    %v1067 = vpop.permute.xlu0 %1066
    %v1069 = vadd.f32 %v1059, %v1067
    %v1070 = vtanh.pop %v1069
    %1072 = vrot.lane.b32.xlu0 %v1070, 64
    %v1073 = vpop.permute.xlu0 %1072
    %v1075 = vmul.f32 %v1057, %v1073
    %vm1076 = vcmp.gt.s32.totalorder %v195, 7
    %v1077 = vsel %vm1076, 1, 0
    %1078 = vset.pattern.permute.xlu0 0
    %1079 = vperm.xlu0 %1078, %v1077
    %v1080 = vpop.permute.xlu0 %1079
    %vm1081 = vcmp.eq.s32.totalorder %v1080, 1
    %v1082 = vsel %vm1081, %v1075, 0.0
    %v1083 = vadd.f32 %v972, %v1082
    %v1084 = vmax.f32 %v973, %v1082
    %v1085 = vcvt.s32.f32 %v195
    %v1086 = vrcp.pop %v1085
    %1088 = vset.pattern.permute.xlu0 0
    %1089 = vperm.xlu0 %1088, %v1086
    %v1090 = vpop.permute.xlu0 %1089
    %v1092 = vmul.f32 %v1083, %v1090
    %1094 = vrot.lane.b32.xlu0 %v1092, 32
    %v1095 = vpop.permute.xlu0 %1094
    %1097 = vst.msk [vmem:[#allocation3] sm:$0xff] %vm201, %v1095
    %1099 = vrot.lane.b32.xlu0 %v1084, 64
    %v1100 = vpop.permute.xlu0 %1099
    %vm1102 = vcmask 523520
    %1103 = vst.msk [vmem:[#allocation3] sm:$0xff] %vm1102, %v1100
    %v1104 = vld [vmem:[#allocation3] sm:$0xff]
    %v1105 = vld [vmem:[%s5] sm:$0xff]
    %v1106 = vld [vmem:[%s5 + $0x8] sm:$0xff]
    %v1107 = vld [vmem:[%s5 + $0x10] sm:$0xff]
    %v1108 = vld [vmem:[%s5 + $0x18] sm:$0xff]
    %v1109 = vld [vmem:[%s5 + $0x20] sm:$0xff]
    %v1110 = vld [vmem:[%s5 + $0x28] sm:$0xff]
    %v1111 = vld [vmem:[%s5 + $0x30] sm:$0xff]
    %v1112 = vld [vmem:[%s5 + $0x38] sm:$0xff]
    %v1113 = vld [vmem:[%s6] sm:$0x1]
    %v1115 = vlaneseq
    %v1116 = vshrl.u32 %v1115, 7
    %v1117 = vsub.s32 0, %v1116
    %v1118 = vrot.slane %v1113, %v1117
    %vm1120 = vcmask 523264
    %v1122 = vsel %vm1120, %v1104, 0
    %1124 = vmatprep.subr.mxu0 0.0
    %1125 = vmatpush1.msra.mxu0 %v1105
    %1126 = vmatprep.subr.mxu0 0.0
    %1127 = vmatpush1.msra.mxu0 %v1106
    %1128 = vmatprep.subr.mxu0 0.0
    %1129 = vmatpush1.msra.mxu0 %v1107
    %1130 = vmatprep.subr.mxu0 0.0
    %1131 = vmatpush1.msra.mxu0 %v1108
    %1132 = vmatprep.subr.mxu0 0.0
    %1133 = vmatpush1.msra.mxu0 %v1109
    %1134 = vmatprep.subr.mxu0 0.0
    %1135 = vmatpush1.msra.mxu0 %v1110
    %1136 = vmatprep.subr.mxu0 0.0
    %1137 = vmatpush1.msra.mxu0 %v1111
    %1138 = vmatprep.subr.mxu0 0.0
    %1139 = vmatpush1.msra.mxu0 %v1112
    %1140 = vmatprep.subr.mxu0 0.0
    %1141 = vmatpush1.msra.mxu0 0.0
    %1142 = vmatprep.subr.mxu0 0.0
    %1143 = vmatpush1.msra.mxu0 0.0
    %1144 = vmatprep.subr.mxu0 0.0
    %1145 = vmatpush1.msra.mxu0 0.0
    %1146 = vmatprep.subr.mxu0 0.0
    %1147 = vmatpush1.msra.mxu0 0.0
    %1148 = vmatprep.subr.mxu0 0.0
    %1149 = vmatpush1.msra.mxu0 0.0
    %1150 = vmatprep.subr.mxu0 0.0
    %1151 = vmatpush1.msra.mxu0 0.0
    %1152 = vmatprep.subr.mxu0 0.0
    %1153 = vmatpush1.msra.mxu0 0.0
    %1154 = vmatprep.subr.mxu0 0.0
    %1155 = vmatpush1.msra.mxu0 0.0
    %1156 = vmatprep.subr.mxu0 0.0
    %1157 = vmatpush1.msra.mxu0 0.0
    %1158 = vmatprep.subr.mxu0 0.0
    %1159 = vmatpush1.msra.mxu0 0.0
    %1160 = vmatprep.subr.mxu0 0.0
    %1161 = vmatpush1.msra.mxu0 0.0
    %1162 = vmatprep.subr.mxu0 0.0
    %1163 = vmatpush1.msra.mxu0 0.0
    %1164 = vmatprep.subr.mxu0 0.0
    %1165 = vmatpush1.msra.mxu0 0.0
    %1166 = vmatprep.subr.mxu0 0.0
    %1167 = vmatpush1.msra.mxu0 0.0
    %1168 = vmatprep.subr.mxu0 0.0
    %1169 = vmatpush1.msra.mxu0 0.0
    %1170 = vmatprep.subr.mxu0 0.0
    %1171 = vmatpush1.msra.mxu0 0.0
    %1172 = vmatprep.subr.mxu0 0.0
    %1173 = vmatpush1.msra.mxu0 0.0
    %1174 = vmatprep.subr.mxu0 0.0
    %1175 = vmatpush1.msra.mxu0 0.0
    %1176 = vmatprep.subr.mxu0 0.0
    %1177 = vmatpush1.msra.mxu0 0.0
    %1178 = vmatprep.subr.mxu0 0.0
    %1179 = vmatpush1.msra.mxu0 0.0
    %1180 = vmatprep.subr.mxu0 0.0
    %1181 = vmatpush1.msra.mxu0 0.0
    %1182 = vmatprep.subr.mxu0 0.0
    %1183 = vmatpush1.msra.mxu0 0.0
    %1184 = vmatprep.subr.mxu0 0.0
    %1185 = vmatpush1.msra.mxu0 0.0
    %1186 = vmatprep.subr.mxu0 0.0
    %1187 = vmatpush1.msra.mxu0 0.0
    %1188 = vmatprep.mubr.f32.mxu0 0.0
    %1189 = vmatmul.mubr.f32.gmra.mrb[0].mxu0 %v1122
    %v1190 = vpop.f32.mrb[0].mxu0
    %v1191 = vadd.f32 %v1118, %v1190
    %v1192 = vpop.f32.mrb[0].mxu0
    %1193 = vdwg.mxu0
    %v1194 = vxor.u32 %v1191, 2147483648
    %v1195 = vmul.f32 %v1194, 1.442695
    %v1196 = vpow.pop %v1195
    %v1197 = vadd.f32 %v1196, 1.0
    %v1198 = vrcp.pop %v1197
    %v1199 = vmul.f32 1.0, %v1198
    %vm1200 = vcmask 15360
    %1201 = vst.msk [vmem:[%s7] sm:$0xff] %vm1200, %v1199
    // Predicated region
    $region34: #{tpu_custom_call.1} parent=1 // pred_check
      _
    $region35: #{tpu_custom_call.1} parent=1 // pred_check_branch
      %1203 = sbr.rel (0) target = $region37
    $region36: #{tpu_custom_call.1} parent=1 // pred_region
      _
    $region37: #{tpu_custom_call.1} parent=1 // pred_fallthru
      _
    // Predicated region
    $region38: #{tpu_custom_call.1} parent=1 // pred_check
      _
    $region39: #{tpu_custom_call.1} parent=1 // pred_check_branch
      %1205 = sbr.rel (0) target = $region41
    $region40: #{tpu_custom_call.1} parent=1 // pred_region
      _
    $region41: #{tpu_custom_call.1} parent=1 // pred_fallthru
      _
    %1206 = vsyncpa [#allocation5], 1

</llo_original>
